<compile_context>
chip_gen: v7x
topology: tpu7x:2x2x1
jax: 0.10.0
libtpu: 0.0.40
codegen_flags: <defaults>
</compile_context>

<pallas_src>
from functools import partial

import numpy as np
import jax
import jax.numpy as jnp
from jax.experimental import pallas as pl
from jax.experimental.pallas import tpu as pltpu

R_COEF = 0.995
N_TAPS = 2000   # matches scipy.signal.dimpulse(..., n=2000) in DC_PreEmph
TN_MAX = 512    # output-tile lane width; keeps VMEM well under default limits


def _round_up(x: int, m: int) -> int:
    return (x + m - 1) // m * m


def _dc_preemph_impulse_response(n: int = N_TAPS, r: float = R_COEF) -> np.ndarray:
    """Analytic impulse response of (1 - z^-1)/(1 - r z^-1), truncated to n taps.

    h[0] = 1, h[k] = (r - 1) * r**(k-1) for k >= 1 (identical to what
    scipy.signal.dimpulse produces in the original PyTorch DC_PreEmph).
    """
    k = np.arange(1, n, dtype=np.float64)
    h = np.concatenate([[1.0], (r - 1.0) * r ** (k - 1.0)])
    return h.astype(np.float32)


def _band_fir_matrix(h: np.ndarray, K: int, Tn: int) -> np.ndarray:
    """Banded overlap-save weight W (K, Tn).

    With xp = x left-zero-padded by P = K - Tn samples, the output tile starting
    at t0 is  y[t0 + j] = sum_m W[m, j] * xp[t0 + m],  where
    W[m, j] = h[j + P - m] if 0 <= j + P - m < N else 0.  The same W is reused
    for every tile (and every batch row), so only (K, Tn) values exist.
    """
    N = h.shape[0]
    P = K - Tn
    m = np.arange(K)[:, None]
    j = np.arange(Tn)[None, :]
    idx = j + P - m
    valid = (idx >= 0) & (idx < N)
    W = np.where(valid, h[np.clip(idx, 0, N - 1)], 0.0)
    return W.astype(np.float32)


# --------------------------------------------------------------------------- #
# Pallas kernel: one MXU matmul per M-tile against the resident banded weight.
# --------------------------------------------------------------------------- #
def _fir_matmul_kernel(xw_ref, w_ref, y_ref):
    # xw_ref: (Mb, K) bf16 windows, w_ref: (K, Tn) bf16 band, y_ref: (Mb, Tn) f32
    y_ref[...] = jnp.dot(
        xw_ref[...],
        w_ref[...],
        preferred_element_type=jnp.float32,
    ).astype(y_ref.dtype)


@partial(jax.jit, static_argnames=("T", "Tn", "n_tiles", "q"))
def _fir_overlap_save(x_all: jnp.ndarray, W: jnp.ndarray, *, T: int, Tn: int,
                      n_tiles: int, q: int) -> jnp.ndarray:
    """x_all: (R, T) f32; W: (K=q*Tn, Tn) bf16  ->  (R, T) f32 causal-FIR output."""
    R = x_all.shape[0]
    K = q * Tn
    P = K - Tn                      # left zero-pad (>= N-1), multiple of Tn

    x_all = x_all.astype(jnp.bfloat16)
    # Left-pad by P for causality, right-pad to a whole number of tiles.
    xp = jnp.pad(x_all, ((0, 0), (P, n_tiles * Tn - T)))
    chunks = xp.reshape(R, n_tiles + q - 1, Tn)

    # Overlap-save windows from q contiguous shifted slices (no gather):
    # window row (r, t) = xp[r, t*Tn : t*Tn + K] = concat_j chunks[r, t + j].
    xw = jnp.concatenate([chunks[:, j:j + n_tiles, :] for j in range(q)], axis=2)
    xw = xw.reshape(R * n_tiles, K)

    M = R * n_tiles
    Mb = 256 if M >= 256 else _round_up(M, 8)
    M_pad = _round_up(M, Mb)
    if M_pad != M:
        xw = jnp.pad(xw, ((0, M_pad - M), (0, 0)))

    y = pl.pallas_call(
        _fir_matmul_kernel,
        out_shape=jax.ShapeDtypeStruct((M_pad, Tn), jnp.float32),
        grid_spec=pl.GridSpec(
            grid=(M_pad // Mb,),
            in_specs=[
                pl.BlockSpec((Mb, K), lambda m: (m, 0)),   # x windows: streamed
                pl.BlockSpec((K, Tn), lambda m: (0, 0)),   # band: VMEM-resident
            ],
            out_specs=pl.BlockSpec((Mb, Tn), lambda m: (m, 0)),
        ),
        compiler_params=pltpu.CompilerParams(
            dimension_semantics=("parallel",),             # v7x dual-TC sharding
        ),
    )(xw, W)

    return y[:M].reshape(R, n_tiles * Tn)[:, :T]


# --------------------------------------------------------------------------- #
# Module-level ports.
# --------------------------------------------------------------------------- #
class DCPreEmphPallas:
    """JAX/Pallas port of pyneuralfx DC_PreEmph (applied to predict & target)."""

    def __init__(self, r: float = R_COEF, n_taps: int = N_TAPS):
        self.h = _dc_preemph_impulse_response(n_taps, r)
        self.n_taps = n_taps
        self._w_cache = {}

    def _band(self, K: int, Tn: int) -> jnp.ndarray:
        key = (K, Tn)
        if key not in self._w_cache:
            self._w_cache[key] = jnp.asarray(
                _band_fir_matrix(self.h, K, Tn), dtype=jnp.bfloat16)
        return self._w_cache[key]

    def __call__(self, output: jnp.ndarray, target: jnp.ndarray):
        # output/target: (B, T, 1) -> (B, T, 1) filtered, same shapes.
        assert output.shape == target.shape and output.shape[-1] == 1
        B, T, _ = output.shape

        # Fuse predict + target into one pallas_call (weight DMA'd/held once,
        # MXU M dimension doubled).
        x_all = jnp.concatenate([output[..., 0], target[..., 0]], axis=0)

        Tn = min(TN_MAX, _round_up(T, 128))            # lane-dense output tile
        n_tiles = pl.cdiv(T, Tn)
        K = _round_up(Tn + self.n_taps - 1, Tn)        # multiple of Tn (and 128)
        q = K // Tn
        W = self._band(K, Tn)

        y = _fir_overlap_save(x_all, W, T=T, Tn=Tn, n_tiles=n_tiles, q=q)
        return y[:B, :, None], y[B:, :, None]


class LossBase:
    """JAX/Pallas port of pyneuralfx `_Loss_Base`."""

    def __init__(self, pre_emp: bool = False):
        self.pre_emp_filter = None
        if pre_emp:
            self.pre_emp_filter = DCPreEmphPallas()

    def forward(self, predict: jnp.ndarray, target: jnp.ndarray):
        # The PyTorch base class forward is literally `pass` (abstract no-op).
        # TODO(synk): concrete subclasses define the actual loss; nothing to compute here.
        return None

    __call__ = forward


# --------------------------------------------------------------------------- #
# Demo / correctness check.
# --------------------------------------------------------------------------- #
if __name__ == "__main__":
    key = jax.random.PRNGKey(0)
    k1, k2 = jax.random.split(key)
    B, T = 2, 256  # small synthetic audio: (batch, samples, channels=1)
    predict = jax.random.normal(k1, (B, T, 1), dtype=jnp.float32)
    target = jax.random.normal(k2, (B, T, 1), dtype=jnp.float32)

    loss_base = LossBase(pre_emp=True)

    # Base-class forward is a no-op, exactly like the PyTorch module.
    assert loss_base.forward(predict, target) is None

    # The actual compute owned by the module: the DC pre-emphasis filter kernel.
    y_pred, y_tgt = loss_base.pre_emp_filter(predict, target)
    y_pred = jax.block_until_ready(y_pred)
    y_tgt = jax.block_until_ready(y_tgt)
    assert y_pred.shape == (B, T, 1) and y_tgt.shape == (B, T, 1)

    # References: causal truncated-FIR filter computed with numpy.
    h = _dc_preemph_impulse_response()
    h_q = np.asarray(jnp.asarray(h, jnp.bfloat16).astype(jnp.float32),
                     dtype=np.float64)  # bf16-quantized taps (matches W band)

    def ref_fir(x, taps):  # x: (B, T) float64, taps: float64
        out = np.zeros((B, T), dtype=np.float64)
        for b in range(B):
            out[b] = np.convolve(x[b], taps)[:T]
        return out[..., None]

    for x_in, y_ker in ((predict, y_pred), (target, y_tgt)):
        x64 = np.asarray(x_in[..., 0], dtype=np.float64)
        x_q = np.asarray(
            jnp.asarray(x_in[..., 0], jnp.bfloat16).astype(jnp.float32),
            dtype=np.float64)  # bf16-quantized input (matches kernel operand)
        # Tight check vs bf16-matched reference (isolates kernel correctness).
        np.testing.assert_allclose(np.asarray(y_ker),
                                   ref_fir(x_q, h_q), atol=2e-3, rtol=0)
        # Loose check vs full-precision reference (overall fidelity).
        np.testing.assert_allclose(np.asarray(y_ker),
                                   ref_fir(x64, h.astype(np.float64)),
                                   atol=5e-2, rtol=0)

    print("KERNEL_OK")
</pallas_src>

<mosaic_0001>
module attributes {stable_mosaic.version = 11 : i64} {
  func.func @_fir_matmul_kernel(%arg0: i32, %arg1: memref<8x2304xbf16, #tpu.memory_space<vmem>>, %arg2: memref<2304x256xbf16, #tpu.memory_space<vmem>>, %arg3: memref<8x256xf32, #tpu.memory_space<vmem>>) attributes {dimension_semantics = [#tpu.dimension_semantics<parallel>], iteration_bounds = array<i64: 1>, scalar_prefetch = 0 : i64, scratch_operands = 0 : i64, tpu.core_type = #tpu.core_type<tc>, window_params = [{transform_indices = @transform_0, window_bounds = array<i64: 8, 2304>}, {pipeline_mode = #tpu.pipeline_mode<synchronous>, transform_indices = @transform_1, window_bounds = array<i64: 2304, 256>}, {transform_indices = @transform_2, window_bounds = array<i64: 8, 256>}]} {
    %c0 = arith.constant 0 : index
    %c0_0 = arith.constant 0 : index
    %0 = vector.load %arg1[%c0, %c0_0] : memref<8x2304xbf16, #tpu.memory_space<vmem>>, vector<8x2304xbf16>
    %c0_1 = arith.constant 0 : index
    %c0_2 = arith.constant 0 : index
    %1 = vector.load %arg2[%c0_1, %c0_2] : memref<2304x256xbf16, #tpu.memory_space<vmem>>, vector<2304x256xbf16>
    %cst = arith.constant dense<0.000000e+00> : vector<8x256xf32>
    %2 = tpu.matmul %0, %1, %cst {dimension_numbers = #tpu.dot_dimension_numbers<[1], [0], [0], [1], [0, 0, 1, 1], [], []>} : vector<8x2304xbf16>, vector<2304x256xbf16>, vector<8x256xf32> -> vector<8x256xf32>
    %c0_3 = arith.constant 0 : index
    %c0_4 = arith.constant 0 : index
    %3 = vector.load %arg3[%c0_3, %c0_4] : memref<8x256xf32, #tpu.memory_space<vmem>>, vector<8x256xf32>
    tpu.vector_store %arg3[%c0_3, %c0_4], %2 {strides = array<i32>} : memref<8x256xf32, #tpu.memory_space<vmem>>, vector<8x256xf32>,
    return
  }
  func.func @transform_0(%arg0: i32) -> (i32, i32) {
    %c0_i32 = arith.constant 0 : i32
    %c0_i32_0 = arith.constant 0 : i32
    return %arg0, %c0_i32 : i32, i32
  }
  func.func @transform_1(%arg0: i32) -> (i32, i32) {
    %c0_i32 = arith.constant 0 : i32
    %c0_i32_0 = arith.constant 0 : i32
    %c0_i32_1 = arith.constant 0 : i32
    return %c0_i32, %c0_i32_0 : i32, i32
  }
  func.func @transform_2(%arg0: i32) -> (i32, i32) {
    %c0_i32 = arith.constant 0 : i32
    %c0_i32_0 = arith.constant 0 : i32
    return %arg0, %c0_i32 : i32, i32
  }
}

</mosaic_0001>

<llo_original>
// kernel: _fir_overlap_save.1
$region0: #{_fir_overlap_save.1}
  #allocation0 [shape = 'u32[]', space=smem, size = 0x4, offset = 0x4, fixed_abs, tag = 'smem constant byte address 0x4 - core index']
  #allocation1 [shape = 'u32[144,128]{1,0:T(1,128)}', space=vmem, size = 0x12000, scoped, tag = 'internal scratch']
  %s0 = inlined_call_operand.vmem [shape: bf16[8,2304], index: 0, kind: input, shape index: {}]
  %s1 = inlined_call_operand.hbm [shape: bf16[2304,256], index: 1, kind: input, shape index: {}]
  %s2 = inlined_call_operand.vmem [shape: f32[8,256], index: 2, kind: output, shape index: {}]
  %s3 = sld [smem:[#allocation0]]
  $region22: #{_fir_overlap_save.1} parent=0
    _
  %s5 = ssub.s32 1, %s3
  %s6 = scalar_select 0, %s5, %s3
  $region1: #{_fir_overlap_save.1} parent=0
    #allocation2 [shape = 'u8[1179648]{0}', space=vmem, size = 0x120000, scoped, tag = 'input window, operand 1, single buffered']
    #allocation3 [shape = 's32[1]{0}', space=sflag, size = 0x4, scoped, tag = 'scoped memory for _fir_overlap_save.1']
    %7 = vsyncpa [#allocation3], 0
    // Predicated region
    $region2: #{_fir_overlap_save.1} parent=1 // pred_check
      _
    $region3: #{_fir_overlap_save.1} parent=1 // pred_check_branch
      %9 = sbr.rel (0) target = $region5
    $region4: #{_fir_overlap_save.1} parent=1 // pred_region
      _
    $region5: #{_fir_overlap_save.1} parent=1 // pred_fallthru
      _
    // Predicated region
    $region6: #{_fir_overlap_save.1} parent=1 // pred_check
      _
    $region7: #{_fir_overlap_save.1} parent=1 // pred_check_branch
      %11 = sbr.rel (0) target = $region9
    $region8: #{_fir_overlap_save.1} parent=1 // pred_region
      %s13 = ssub.s32 36864, 36864
      %14 = vsyncadd [#allocation3], %s13
      %s15 = sshll.u32 [#allocation2], 4
      %s16 = int_to_ptr.vmem [resolvable:$true] %s15
      %21 = dma.hbm_to_vmem [thread:$0]  %s1, 36864, %s16, [#allocation3], 128, 128, 8
    $region9: #{_fir_overlap_save.1} parent=1 // pred_fallthru
      _
    // Predicated region
    $region10: #{_fir_overlap_save.1} parent=1 // pred_check
      _
    $region11: #{_fir_overlap_save.1} parent=1 // pred_check_branch
      %23 = sbr.rel (0) target = $region13
    $region12: #{_fir_overlap_save.1} parent=1 // pred_region
      %24 = dma.done [#allocation3], 36864
    $region13: #{_fir_overlap_save.1} parent=1 // pred_fallthru
      _
    %v25 = vld [vmem:[%s0] sm:$0xff]
    %v26 = vld [vmem:[%s0 + $0x8] sm:$0xff]
    %v27 = vld [vmem:[%s0 + $0x10] sm:$0xff]
    %v28 = vld [vmem:[%s0 + $0x18] sm:$0xff]
    %v29 = vld [vmem:[%s0 + $0x20] sm:$0xff]
    %v30 = vld [vmem:[%s0 + $0x28] sm:$0xff]
    %v31 = vld [vmem:[%s0 + $0x30] sm:$0xff]
    %v32 = vld [vmem:[%s0 + $0x38] sm:$0xff]
    %v33 = vld [vmem:[%s0 + $0x40] sm:$0xff]
    %v34 = vld [vmem:[#allocation2] sm:$0xff]
    %v35 = vld [vmem:[#allocation2 + $0x8] sm:$0xff]
    %v36 = vld [vmem:[#allocation2 + $0x10] sm:$0xff]
    %v37 = vld [vmem:[#allocation2 + $0x18] sm:$0xff]
    %v38 = vld [vmem:[#allocation2 + $0x20] sm:$0xff]
    %v39 = vld [vmem:[#allocation2 + $0x28] sm:$0xff]
    %v40 = vld [vmem:[#allocation2 + $0x30] sm:$0xff]
    %v41 = vld [vmem:[#allocation2 + $0x38] sm:$0xff]
    %v42 = vld [vmem:[#allocation2 + $0x40] sm:$0xff]
    %v43 = vld [vmem:[#allocation2 + $0x48] sm:$0xff]
    %v44 = vld [vmem:[#allocation2 + $0x50] sm:$0xff]
    %v45 = vld [vmem:[#allocation2 + $0x58] sm:$0xff]
    %v46 = vld [vmem:[#allocation2 + $0x60] sm:$0xff]
    %v47 = vld [vmem:[#allocation2 + $0x68] sm:$0xff]
    %v48 = vld [vmem:[#allocation2 + $0x70] sm:$0xff]
    %v49 = vld [vmem:[#allocation2 + $0x78] sm:$0xff]
    %v50 = vld [vmem:[#allocation2 + $0x80] sm:$0xff]
    %v51 = vld [vmem:[#allocation2 + $0x88] sm:$0xff]
    %v52 = vld [vmem:[#allocation2 + $0x90] sm:$0xff]
    %v53 = vld [vmem:[#allocation2 + $0x98] sm:$0xff]
    %v54 = vld [vmem:[#allocation2 + $0xa0] sm:$0xff]
    %v55 = vld [vmem:[#allocation2 + $0xa8] sm:$0xff]
    %v56 = vld [vmem:[#allocation2 + $0xb0] sm:$0xff]
    %v57 = vld [vmem:[#allocation2 + $0xb8] sm:$0xff]
    %v58 = vld [vmem:[#allocation2 + $0xc0] sm:$0xff]
    %v59 = vld [vmem:[#allocation2 + $0xc8] sm:$0xff]
    %v60 = vld [vmem:[#allocation2 + $0xd0] sm:$0xff]
    %v61 = vld [vmem:[#allocation2 + $0xd8] sm:$0xff]
    %v62 = vld [vmem:[#allocation2 + $0xe0] sm:$0xff]
    %v63 = vld [vmem:[#allocation2 + $0xe8] sm:$0xff]
    %v64 = vld [vmem:[#allocation2 + $0xf0] sm:$0xff]
    %v65 = vld [vmem:[#allocation2 + $0xf8] sm:$0xff]
    %v66 = vld [vmem:[#allocation2 + $0x100] sm:$0xff]
    %v67 = vld [vmem:[#allocation2 + $0x108] sm:$0xff]
    %v68 = vld [vmem:[#allocation2 + $0x110] sm:$0xff]
    %v69 = vld [vmem:[#allocation2 + $0x118] sm:$0xff]
    %v70 = vld [vmem:[#allocation2 + $0x120] sm:$0xff]
    %v71 = vld [vmem:[#allocation2 + $0x128] sm:$0xff]
    %v72 = vld [vmem:[#allocation2 + $0x130] sm:$0xff]
    %v73 = vld [vmem:[#allocation2 + $0x138] sm:$0xff]
    %v74 = vld [vmem:[#allocation2 + $0x140] sm:$0xff]
    %v75 = vld [vmem:[#allocation2 + $0x148] sm:$0xff]
    %v76 = vld [vmem:[#allocation2 + $0x150] sm:$0xff]
    %v77 = vld [vmem:[#allocation2 + $0x158] sm:$0xff]
    %v78 = vld [vmem:[#allocation2 + $0x160] sm:$0xff]
    %v79 = vld [vmem:[#allocation2 + $0x168] sm:$0xff]
    %v80 = vld [vmem:[#allocation2 + $0x170] sm:$0xff]
    %v81 = vld [vmem:[#allocation2 + $0x178] sm:$0xff]
    %v82 = vld [vmem:[#allocation2 + $0x180] sm:$0xff]
    %v83 = vld [vmem:[#allocation2 + $0x188] sm:$0xff]
    %v84 = vld [vmem:[#allocation2 + $0x190] sm:$0xff]
    %v85 = vld [vmem:[#allocation2 + $0x198] sm:$0xff]
    %v86 = vld [vmem:[#allocation2 + $0x1a0] sm:$0xff]
    %v87 = vld [vmem:[#allocation2 + $0x1a8] sm:$0xff]
    %v88 = vld [vmem:[#allocation2 + $0x1b0] sm:$0xff]
    %v89 = vld [vmem:[#allocation2 + $0x1b8] sm:$0xff]
    %v90 = vld [vmem:[#allocation2 + $0x1c0] sm:$0xff]
    %v91 = vld [vmem:[#allocation2 + $0x1c8] sm:$0xff]
    %v92 = vld [vmem:[#allocation2 + $0x1d0] sm:$0xff]
    %v93 = vld [vmem:[#allocation2 + $0x1d8] sm:$0xff]
    %v94 = vld [vmem:[#allocation2 + $0x1e0] sm:$0xff]
    %v95 = vld [vmem:[#allocation2 + $0x1e8] sm:$0xff]
    %v96 = vld [vmem:[#allocation2 + $0x1f0] sm:$0xff]
    %v97 = vld [vmem:[#allocation2 + $0x1f8] sm:$0xff]
    %v98 = vld [vmem:[#allocation2 + $0x200] sm:$0xff]
    %v99 = vld [vmem:[#allocation2 + $0x208] sm:$0xff]
    %v100 = vld [vmem:[#allocation2 + $0x210] sm:$0xff]
    %v101 = vld [vmem:[#allocation2 + $0x218] sm:$0xff]
    %v102 = vld [vmem:[#allocation2 + $0x220] sm:$0xff]
    %v103 = vld [vmem:[#allocation2 + $0x228] sm:$0xff]
    %v104 = vld [vmem:[#allocation2 + $0x230] sm:$0xff]
    %v105 = vld [vmem:[#allocation2 + $0x238] sm:$0xff]
    %v106 = vld [vmem:[#allocation2 + $0x240] sm:$0xff]
    %v107 = vld [vmem:[#allocation2 + $0x248] sm:$0xff]
    %v108 = vld [vmem:[#allocation2 + $0x250] sm:$0xff]
    %v109 = vld [vmem:[#allocation2 + $0x258] sm:$0xff]
    %v110 = vld [vmem:[#allocation2 + $0x260] sm:$0xff]
    %v111 = vld [vmem:[#allocation2 + $0x268] sm:$0xff]
    %v112 = vld [vmem:[#allocation2 + $0x270] sm:$0xff]
    %v113 = vld [vmem:[#allocation2 + $0x278] sm:$0xff]
    %v114 = vld [vmem:[#allocation2 + $0x280] sm:$0xff]
    %v115 = vld [vmem:[#allocation2 + $0x288] sm:$0xff]
    %v116 = vld [vmem:[#allocation2 + $0x290] sm:$0xff]
    %v117 = vld [vmem:[#allocation2 + $0x298] sm:$0xff]
    %v118 = vld [vmem:[#allocation2 + $0x2a0] sm:$0xff]
    %v119 = vld [vmem:[#allocation2 + $0x2a8] sm:$0xff]
    %v120 = vld [vmem:[#allocation2 + $0x2b0] sm:$0xff]
    %v121 = vld [vmem:[#allocation2 + $0x2b8] sm:$0xff]
    %v122 = vld [vmem:[#allocation2 + $0x2c0] sm:$0xff]
    %v123 = vld [vmem:[#allocation2 + $0x2c8] sm:$0xff]
    %v124 = vld [vmem:[#allocation2 + $0x2d0] sm:$0xff]
    %v125 = vld [vmem:[#allocation2 + $0x2d8] sm:$0xff]
    %v126 = vld [vmem:[#allocation2 + $0x2e0] sm:$0xff]
    %v127 = vld [vmem:[#allocation2 + $0x2e8] sm:$0xff]
    %v128 = vld [vmem:[#allocation2 + $0x2f0] sm:$0xff]
    %v129 = vld [vmem:[#allocation2 + $0x2f8] sm:$0xff]
    %v130 = vld [vmem:[#allocation2 + $0x300] sm:$0xff]
    %v131 = vld [vmem:[#allocation2 + $0x308] sm:$0xff]
    %v132 = vld [vmem:[#allocation2 + $0x310] sm:$0xff]
    %v133 = vld [vmem:[#allocation2 + $0x318] sm:$0xff]
    %v134 = vld [vmem:[#allocation2 + $0x320] sm:$0xff]
    %v135 = vld [vmem:[#allocation2 + $0x328] sm:$0xff]
    %v136 = vld [vmem:[#allocation2 + $0x330] sm:$0xff]
    %v137 = vld [vmem:[#allocation2 + $0x338] sm:$0xff]
    %v138 = vld [vmem:[#allocation2 + $0x340] sm:$0xff]
    %v139 = vld [vmem:[#allocation2 + $0x348] sm:$0xff]
    %v140 = vld [vmem:[#allocation2 + $0x350] sm:$0xff]
    %v141 = vld [vmem:[#allocation2 + $0x358] sm:$0xff]
    %v142 = vld [vmem:[#allocation2 + $0x360] sm:$0xff]
    %v143 = vld [vmem:[#allocation2 + $0x368] sm:$0xff]
    %v144 = vld [vmem:[#allocation2 + $0x370] sm:$0xff]
    %v145 = vld [vmem:[#allocation2 + $0x378] sm:$0xff]
    %v146 = vld [vmem:[#allocation2 + $0x380] sm:$0xff]
    %v147 = vld [vmem:[#allocation2 + $0x388] sm:$0xff]
    %v148 = vld [vmem:[#allocation2 + $0x390] sm:$0xff]
    %v149 = vld [vmem:[#allocation2 + $0x398] sm:$0xff]
    %v150 = vld [vmem:[#allocation2 + $0x3a0] sm:$0xff]
    %v151 = vld [vmem:[#allocation2 + $0x3a8] sm:$0xff]
    %v152 = vld [vmem:[#allocation2 + $0x3b0] sm:$0xff]
    %v153 = vld [vmem:[#allocation2 + $0x3b8] sm:$0xff]
    %v154 = vld [vmem:[#allocation2 + $0x3c0] sm:$0xff]
    %v155 = vld [vmem:[#allocation2 + $0x3c8] sm:$0xff]
    %v156 = vld [vmem:[#allocation2 + $0x3d0] sm:$0xff]
    %v157 = vld [vmem:[#allocation2 + $0x3d8] sm:$0xff]
    %v158 = vld [vmem:[#allocation2 + $0x3e0] sm:$0xff]
    %v159 = vld [vmem:[#allocation2 + $0x3e8] sm:$0xff]
    %v160 = vld [vmem:[#allocation2 + $0x3f0] sm:$0xff]
    %v161 = vld [vmem:[#allocation2 + $0x3f8] sm:$0xff]
    %v162 = vld [vmem:[#allocation2 + $0x400] sm:$0xff]
    %v163 = vld [vmem:[#allocation2 + $0x408] sm:$0xff]
    %v164 = vld [vmem:[#allocation2 + $0x410] sm:$0xff]
    %v165 = vld [vmem:[#allocation2 + $0x418] sm:$0xff]
    %v166 = vld [vmem:[#allocation2 + $0x420] sm:$0xff]
    %v167 = vld [vmem:[#allocation2 + $0x428] sm:$0xff]
    %v168 = vld [vmem:[#allocation2 + $0x430] sm:$0xff]
    %v169 = vld [vmem:[#allocation2 + $0x438] sm:$0xff]
    %v170 = vld [vmem:[#allocation2 + $0x440] sm:$0xff]
    %v171 = vld [vmem:[#allocation2 + $0x448] sm:$0xff]
    %v172 = vld [vmem:[#allocation2 + $0x450] sm:$0xff]
    %v173 = vld [vmem:[#allocation2 + $0x458] sm:$0xff]
    %v174 = vld [vmem:[#allocation2 + $0x460] sm:$0xff]
    %v175 = vld [vmem:[#allocation2 + $0x468] sm:$0xff]
    %v176 = vld [vmem:[#allocation2 + $0x470] sm:$0xff]
    %v177 = vld [vmem:[#allocation2 + $0x478] sm:$0xff]
    %v178 = vld [vmem:[#allocation2 + $0x480] sm:$0xff]
    %v179 = vld [vmem:[#allocation2 + $0x488] sm:$0xff]
    %v180 = vld [vmem:[#allocation2 + $0x490] sm:$0xff]
    %v181 = vld [vmem:[#allocation2 + $0x498] sm:$0xff]
    %v182 = vld [vmem:[#allocation2 + $0x4a0] sm:$0xff]
    %v183 = vld [vmem:[#allocation2 + $0x4a8] sm:$0xff]
    %v184 = vld [vmem:[#allocation2 + $0x4b0] sm:$0xff]
    %v185 = vld [vmem:[#allocation2 + $0x4b8] sm:$0xff]
    %v186 = vld [vmem:[#allocation2 + $0x4c0] sm:$0xff]
    %v187 = vld [vmem:[#allocation2 + $0x4c8] sm:$0xff]
    %v188 = vld [vmem:[#allocation2 + $0x4d0] sm:$0xff]
    %v189 = vld [vmem:[#allocation2 + $0x4d8] sm:$0xff]
    %v190 = vld [vmem:[#allocation2 + $0x4e0] sm:$0xff]
    %v191 = vld [vmem:[#allocation2 + $0x4e8] sm:$0xff]
    %v192 = vld [vmem:[#allocation2 + $0x4f0] sm:$0xff]
    %v193 = vld [vmem:[#allocation2 + $0x4f8] sm:$0xff]
    %v194 = vld [vmem:[#allocation2 + $0x500] sm:$0xff]
    %v195 = vld [vmem:[#allocation2 + $0x508] sm:$0xff]
    %v196 = vld [vmem:[#allocation2 + $0x510] sm:$0xff]
    %v197 = vld [vmem:[#allocation2 + $0x518] sm:$0xff]
    %v198 = vld [vmem:[#allocation2 + $0x520] sm:$0xff]
    %v199 = vld [vmem:[#allocation2 + $0x528] sm:$0xff]
    %v200 = vld [vmem:[#allocation2 + $0x530] sm:$0xff]
    %v201 = vld [vmem:[#allocation2 + $0x538] sm:$0xff]
    %v202 = vld [vmem:[#allocation2 + $0x540] sm:$0xff]
    %v203 = vld [vmem:[#allocation2 + $0x548] sm:$0xff]
    %v204 = vld [vmem:[#allocation2 + $0x550] sm:$0xff]
    %v205 = vld [vmem:[#allocation2 + $0x558] sm:$0xff]
    %v206 = vld [vmem:[#allocation2 + $0x560] sm:$0xff]
    %v207 = vld [vmem:[#allocation2 + $0x568] sm:$0xff]
    %v208 = vld [vmem:[#allocation2 + $0x570] sm:$0xff]
    %v209 = vld [vmem:[#allocation2 + $0x578] sm:$0xff]
    %v210 = vld [vmem:[#allocation2 + $0x580] sm:$0xff]
    %v211 = vld [vmem:[#allocation2 + $0x588] sm:$0xff]
    %v212 = vld [vmem:[#allocation2 + $0x590] sm:$0xff]
    %v213 = vld [vmem:[#allocation2 + $0x598] sm:$0xff]
    %v214 = vld [vmem:[#allocation2 + $0x5a0] sm:$0xff]
    %v215 = vld [vmem:[#allocation2 + $0x5a8] sm:$0xff]
    %v216 = vld [vmem:[#allocation2 + $0x5b0] sm:$0xff]
    %v217 = vld [vmem:[#allocation2 + $0x5b8] sm:$0xff]
    %v218 = vld [vmem:[#allocation2 + $0x5c0] sm:$0xff]
    %v219 = vld [vmem:[#allocation2 + $0x5c8] sm:$0xff]
    %v220 = vld [vmem:[#allocation2 + $0x5d0] sm:$0xff]
    %v221 = vld [vmem:[#allocation2 + $0x5d8] sm:$0xff]
    %v222 = vld [vmem:[#allocation2 + $0x5e0] sm:$0xff]
    %v223 = vld [vmem:[#allocation2 + $0x5e8] sm:$0xff]
    %v224 = vld [vmem:[#allocation2 + $0x5f0] sm:$0xff]
    %v225 = vld [vmem:[#allocation2 + $0x5f8] sm:$0xff]
    %v226 = vld [vmem:[#allocation2 + $0x600] sm:$0xff]
    %v227 = vld [vmem:[#allocation2 + $0x608] sm:$0xff]
    %v228 = vld [vmem:[#allocation2 + $0x610] sm:$0xff]
    %v229 = vld [vmem:[#allocation2 + $0x618] sm:$0xff]
    %v230 = vld [vmem:[#allocation2 + $0x620] sm:$0xff]
    %v231 = vld [vmem:[#allocation2 + $0x628] sm:$0xff]
    %v232 = vld [vmem:[#allocation2 + $0x630] sm:$0xff]
    %v233 = vld [vmem:[#allocation2 + $0x638] sm:$0xff]
    %v234 = vld [vmem:[#allocation2 + $0x640] sm:$0xff]
    %v235 = vld [vmem:[#allocation2 + $0x648] sm:$0xff]
    %v236 = vld [vmem:[#allocation2 + $0x650] sm:$0xff]
    %v237 = vld [vmem:[#allocation2 + $0x658] sm:$0xff]
    %v238 = vld [vmem:[#allocation2 + $0x660] sm:$0xff]
    %v239 = vld [vmem:[#allocation2 + $0x668] sm:$0xff]
    %v240 = vld [vmem:[#allocation2 + $0x670] sm:$0xff]
    %v241 = vld [vmem:[#allocation2 + $0x678] sm:$0xff]
    %v242 = vld [vmem:[#allocation2 + $0x680] sm:$0xff]
    %v243 = vld [vmem:[#allocation2 + $0x688] sm:$0xff]
    %v244 = vld [vmem:[#allocation2 + $0x690] sm:$0xff]
    %v245 = vld [vmem:[#allocation2 + $0x698] sm:$0xff]
    %v246 = vld [vmem:[#allocation2 + $0x6a0] sm:$0xff]
    %v247 = vld [vmem:[#allocation2 + $0x6a8] sm:$0xff]
    %v248 = vld [vmem:[#allocation2 + $0x6b0] sm:$0xff]
    %v249 = vld [vmem:[#allocation2 + $0x6b8] sm:$0xff]
    %v250 = vld [vmem:[#allocation2 + $0x6c0] sm:$0xff]
    %v251 = vld [vmem:[#allocation2 + $0x6c8] sm:$0xff]
    %v252 = vld [vmem:[#allocation2 + $0x6d0] sm:$0xff]
    %v253 = vld [vmem:[#allocation2 + $0x6d8] sm:$0xff]
    %v254 = vld [vmem:[#allocation2 + $0x6e0] sm:$0xff]
    %v255 = vld [vmem:[#allocation2 + $0x6e8] sm:$0xff]
    %v256 = vld [vmem:[#allocation2 + $0x6f0] sm:$0xff]
    %v257 = vld [vmem:[#allocation2 + $0x6f8] sm:$0xff]
    %v258 = vld [vmem:[#allocation2 + $0x700] sm:$0xff]
    %v259 = vld [vmem:[#allocation2 + $0x708] sm:$0xff]
    %v260 = vld [vmem:[#allocation2 + $0x710] sm:$0xff]
    %v261 = vld [vmem:[#allocation2 + $0x718] sm:$0xff]
    %v262 = vld [vmem:[#allocation2 + $0x720] sm:$0xff]
    %v263 = vld [vmem:[#allocation2 + $0x728] sm:$0xff]
    %v264 = vld [vmem:[#allocation2 + $0x730] sm:$0xff]
    %v265 = vld [vmem:[#allocation2 + $0x738] sm:$0xff]
    %v266 = vld [vmem:[#allocation2 + $0x740] sm:$0xff]
    %v267 = vld [vmem:[#allocation2 + $0x748] sm:$0xff]
    %v268 = vld [vmem:[#allocation2 + $0x750] sm:$0xff]
    %v269 = vld [vmem:[#allocation2 + $0x758] sm:$0xff]
    %v270 = vld [vmem:[#allocation2 + $0x760] sm:$0xff]
    %v271 = vld [vmem:[#allocation2 + $0x768] sm:$0xff]
    %v272 = vld [vmem:[#allocation2 + $0x770] sm:$0xff]
    %v273 = vld [vmem:[#allocation2 + $0x778] sm:$0xff]
    %v274 = vld [vmem:[#allocation2 + $0x780] sm:$0xff]
    %v275 = vld [vmem:[#allocation2 + $0x788] sm:$0xff]
    %v276 = vld [vmem:[#allocation2 + $0x790] sm:$0xff]
    %v277 = vld [vmem:[#allocation2 + $0x798] sm:$0xff]
    %v278 = vld [vmem:[#allocation2 + $0x7a0] sm:$0xff]
    %v279 = vld [vmem:[#allocation2 + $0x7a8] sm:$0xff]
    %v280 = vld [vmem:[#allocation2 + $0x7b0] sm:$0xff]
    %v281 = vld [vmem:[#allocation2 + $0x7b8] sm:$0xff]
    %v282 = vld [vmem:[#allocation2 + $0x7c0] sm:$0xff]
    %v283 = vld [vmem:[#allocation2 + $0x7c8] sm:$0xff]
    %v284 = vld [vmem:[#allocation2 + $0x7d0] sm:$0xff]
    %v285 = vld [vmem:[#allocation2 + $0x7d8] sm:$0xff]
    %v286 = vld [vmem:[#allocation2 + $0x7e0] sm:$0xff]
    %v287 = vld [vmem:[#allocation2 + $0x7e8] sm:$0xff]
    %v288 = vld [vmem:[#allocation2 + $0x7f0] sm:$0xff]
    %v289 = vld [vmem:[#allocation2 + $0x7f8] sm:$0xff]
    %v290 = vld [vmem:[#allocation2 + $0x800] sm:$0xff]
    %v291 = vld [vmem:[#allocation2 + $0x808] sm:$0xff]
    %v292 = vld [vmem:[#allocation2 + $0x810] sm:$0xff]
    %v293 = vld [vmem:[#allocation2 + $0x818] sm:$0xff]
    %v294 = vld [vmem:[#allocation2 + $0x820] sm:$0xff]
    %v295 = vld [vmem:[#allocation2 + $0x828] sm:$0xff]
    %v296 = vld [vmem:[#allocation2 + $0x830] sm:$0xff]
    %v297 = vld [vmem:[#allocation2 + $0x838] sm:$0xff]
    %v298 = vld [vmem:[#allocation2 + $0x840] sm:$0xff]
    %v299 = vld [vmem:[#allocation2 + $0x848] sm:$0xff]
    %v300 = vld [vmem:[#allocation2 + $0x850] sm:$0xff]
    %v301 = vld [vmem:[#allocation2 + $0x858] sm:$0xff]
    %v302 = vld [vmem:[#allocation2 + $0x860] sm:$0xff]
    %v303 = vld [vmem:[#allocation2 + $0x868] sm:$0xff]
    %v304 = vld [vmem:[#allocation2 + $0x870] sm:$0xff]
    %v305 = vld [vmem:[#allocation2 + $0x878] sm:$0xff]
    %v306 = vld [vmem:[#allocation2 + $0x880] sm:$0xff]
    %v307 = vld [vmem:[#allocation2 + $0x888] sm:$0xff]
    %v308 = vld [vmem:[#allocation2 + $0x890] sm:$0xff]
    %v309 = vld [vmem:[#allocation2 + $0x898] sm:$0xff]
    %v310 = vld [vmem:[#allocation2 + $0x8a0] sm:$0xff]
    %v311 = vld [vmem:[#allocation2 + $0x8a8] sm:$0xff]
    %v312 = vld [vmem:[#allocation2 + $0x8b0] sm:$0xff]
    %v313 = vld [vmem:[#allocation2 + $0x8b8] sm:$0xff]
    %v314 = vld [vmem:[#allocation2 + $0x8c0] sm:$0xff]
    %v315 = vld [vmem:[#allocation2 + $0x8c8] sm:$0xff]
    %v316 = vld [vmem:[#allocation2 + $0x8d0] sm:$0xff]
    %v317 = vld [vmem:[#allocation2 + $0x8d8] sm:$0xff]
    %v318 = vld [vmem:[#allocation2 + $0x8e0] sm:$0xff]
    %v319 = vld [vmem:[#allocation2 + $0x8e8] sm:$0xff]
    %v320 = vld [vmem:[#allocation2 + $0x8f0] sm:$0xff]
    %v321 = vld [vmem:[#allocation2 + $0x8f8] sm:$0xff]
    %v331 = vunpack.c.l.b16 %v25
    %v332 = vunpack.c.h.b16 %v25
    %v333 = vunpack.c.l.b16 %v26
    %v334 = vunpack.c.h.b16 %v26
    %v335 = vunpack.c.l.b16 %v27
    %v336 = vunpack.c.h.b16 %v27
    %v337 = vunpack.c.l.b16 %v28
    %v338 = vunpack.c.h.b16 %v28
    %v339 = vunpack.c.l.b16 %v29
    %v340 = vunpack.c.h.b16 %v29
    %v341 = vunpack.c.l.b16 %v30
    %v342 = vunpack.c.h.b16 %v30
    %v343 = vunpack.c.l.b16 %v31
    %v344 = vunpack.c.h.b16 %v31
    %v345 = vunpack.c.l.b16 %v32
    %v346 = vunpack.c.h.b16 %v32
    %v347 = vunpack.c.l.b16 %v33
    %v348 = vunpack.c.h.b16 %v33
    %v349 = vpack.c.b16 %v331, %v331
    %v350 = vpack.c.b16 %v332, %v332
    %v351 = vpack.c.b16 %v333, %v333
    %v352 = vpack.c.b16 %v334, %v334
    %v353 = vpack.c.b16 %v335, %v335
    %v354 = vpack.c.b16 %v336, %v336
    %v355 = vpack.c.b16 %v337, %v337
    %v356 = vpack.c.b16 %v338, %v338
    %v357 = vpack.c.b16 %v339, %v339
    %v358 = vpack.c.b16 %v340, %v340
    %v359 = vpack.c.b16 %v341, %v341
    %v360 = vpack.c.b16 %v342, %v342
    %v361 = vpack.c.b16 %v343, %v343
    %v362 = vpack.c.b16 %v344, %v344
    %v363 = vpack.c.b16 %v345, %v345
    %v364 = vpack.c.b16 %v346, %v346
    %v365 = vpack.c.b16 %v347, %v347
    %v366 = vpack.c.b16 %v348, %v348
    %v673 = vunpack.c.l.b16 %v34
    %v674 = vunpack.c.h.b16 %v34
    %v675 = vunpack.c.l.b16 %v35
    %v676 = vunpack.c.h.b16 %v35
    %v677 = vunpack.c.l.b16 %v36
    %v678 = vunpack.c.h.b16 %v36
    %v679 = vunpack.c.l.b16 %v37
    %v680 = vunpack.c.h.b16 %v37
    %v681 = vunpack.c.l.b16 %v38
    %v682 = vunpack.c.h.b16 %v38
    %v683 = vunpack.c.l.b16 %v39
    %v684 = vunpack.c.h.b16 %v39
    %v685 = vunpack.c.l.b16 %v40
    %v686 = vunpack.c.h.b16 %v40
    %v687 = vunpack.c.l.b16 %v41
    %v688 = vunpack.c.h.b16 %v41
    %v689 = vunpack.c.l.b16 %v42
    %v690 = vunpack.c.h.b16 %v42
    %v691 = vunpack.c.l.b16 %v43
    %v692 = vunpack.c.h.b16 %v43
    %v693 = vunpack.c.l.b16 %v44
    %v694 = vunpack.c.h.b16 %v44
    %v695 = vunpack.c.l.b16 %v45
    %v696 = vunpack.c.h.b16 %v45
    %v697 = vunpack.c.l.b16 %v46
    %v698 = vunpack.c.h.b16 %v46
    %v699 = vunpack.c.l.b16 %v47
    %v700 = vunpack.c.h.b16 %v47
    %v701 = vunpack.c.l.b16 %v48
    %v702 = vunpack.c.h.b16 %v48
    %v703 = vunpack.c.l.b16 %v49
    %v704 = vunpack.c.h.b16 %v49
    %v705 = vunpack.c.l.b16 %v50
    %v706 = vunpack.c.h.b16 %v50
    %v707 = vunpack.c.l.b16 %v51
    %v708 = vunpack.c.h.b16 %v51
    %v709 = vunpack.c.l.b16 %v52
    %v710 = vunpack.c.h.b16 %v52
    %v711 = vunpack.c.l.b16 %v53
    %v712 = vunpack.c.h.b16 %v53
    %v713 = vunpack.c.l.b16 %v54
    %v714 = vunpack.c.h.b16 %v54
    %v715 = vunpack.c.l.b16 %v55
    %v716 = vunpack.c.h.b16 %v55
    %v717 = vunpack.c.l.b16 %v56
    %v718 = vunpack.c.h.b16 %v56
    %v719 = vunpack.c.l.b16 %v57
    %v720 = vunpack.c.h.b16 %v57
    %v721 = vunpack.c.l.b16 %v58
    %v722 = vunpack.c.h.b16 %v58
    %v723 = vunpack.c.l.b16 %v59
    %v724 = vunpack.c.h.b16 %v59
    %v725 = vunpack.c.l.b16 %v60
    %v726 = vunpack.c.h.b16 %v60
    %v727 = vunpack.c.l.b16 %v61
    %v728 = vunpack.c.h.b16 %v61
    %v729 = vunpack.c.l.b16 %v62
    %v730 = vunpack.c.h.b16 %v62
    %v731 = vunpack.c.l.b16 %v63
    %v732 = vunpack.c.h.b16 %v63
    %v733 = vunpack.c.l.b16 %v64
    %v734 = vunpack.c.h.b16 %v64
    %v735 = vunpack.c.l.b16 %v65
    %v736 = vunpack.c.h.b16 %v65
    %v737 = vunpack.c.l.b16 %v66
    %v738 = vunpack.c.h.b16 %v66
    %v739 = vunpack.c.l.b16 %v67
    %v740 = vunpack.c.h.b16 %v67
    %v741 = vunpack.c.l.b16 %v68
    %v742 = vunpack.c.h.b16 %v68
    %v743 = vunpack.c.l.b16 %v69
    %v744 = vunpack.c.h.b16 %v69
    %v745 = vunpack.c.l.b16 %v70
    %v746 = vunpack.c.h.b16 %v70
    %v747 = vunpack.c.l.b16 %v71
    %v748 = vunpack.c.h.b16 %v71
    %v749 = vunpack.c.l.b16 %v72
    %v750 = vunpack.c.h.b16 %v72
    %v751 = vunpack.c.l.b16 %v73
    %v752 = vunpack.c.h.b16 %v73
    %v753 = vunpack.c.l.b16 %v74
    %v754 = vunpack.c.h.b16 %v74
    %v755 = vunpack.c.l.b16 %v75
    %v756 = vunpack.c.h.b16 %v75
    %v757 = vunpack.c.l.b16 %v76
    %v758 = vunpack.c.h.b16 %v76
    %v759 = vunpack.c.l.b16 %v77
    %v760 = vunpack.c.h.b16 %v77
    %v761 = vunpack.c.l.b16 %v78
    %v762 = vunpack.c.h.b16 %v78
    %v763 = vunpack.c.l.b16 %v79
    %v764 = vunpack.c.h.b16 %v79
    %v765 = vunpack.c.l.b16 %v80
    %v766 = vunpack.c.h.b16 %v80
    %v767 = vunpack.c.l.b16 %v81
    %v768 = vunpack.c.h.b16 %v81
    %v769 = vunpack.c.l.b16 %v82
    %v770 = vunpack.c.h.b16 %v82
    %v771 = vunpack.c.l.b16 %v83
    %v772 = vunpack.c.h.b16 %v83
    %v773 = vunpack.c.l.b16 %v84
    %v774 = vunpack.c.h.b16 %v84
    %v775 = vunpack.c.l.b16 %v85
    %v776 = vunpack.c.h.b16 %v85
    %v777 = vunpack.c.l.b16 %v86
    %v778 = vunpack.c.h.b16 %v86
    %v779 = vunpack.c.l.b16 %v87
    %v780 = vunpack.c.h.b16 %v87
    %v781 = vunpack.c.l.b16 %v88
    %v782 = vunpack.c.h.b16 %v88
    %v783 = vunpack.c.l.b16 %v89
    %v784 = vunpack.c.h.b16 %v89
    %v785 = vunpack.c.l.b16 %v90
    %v786 = vunpack.c.h.b16 %v90
    %v787 = vunpack.c.l.b16 %v91
    %v788 = vunpack.c.h.b16 %v91
    %v789 = vunpack.c.l.b16 %v92
    %v790 = vunpack.c.h.b16 %v92
    %v791 = vunpack.c.l.b16 %v93
    %v792 = vunpack.c.h.b16 %v93
    %v793 = vunpack.c.l.b16 %v94
    %v794 = vunpack.c.h.b16 %v94
    %v795 = vunpack.c.l.b16 %v95
    %v796 = vunpack.c.h.b16 %v95
    %v797 = vunpack.c.l.b16 %v96
    %v798 = vunpack.c.h.b16 %v96
    %v799 = vunpack.c.l.b16 %v97
    %v800 = vunpack.c.h.b16 %v97
    %v801 = vunpack.c.l.b16 %v98
    %v802 = vunpack.c.h.b16 %v98
    %v803 = vunpack.c.l.b16 %v99
    %v804 = vunpack.c.h.b16 %v99
    %v805 = vunpack.c.l.b16 %v100
    %v806 = vunpack.c.h.b16 %v100
    %v807 = vunpack.c.l.b16 %v101
    %v808 = vunpack.c.h.b16 %v101
    %v809 = vunpack.c.l.b16 %v102
    %v810 = vunpack.c.h.b16 %v102
    %v811 = vunpack.c.l.b16 %v103
    %v812 = vunpack.c.h.b16 %v103
    %v813 = vunpack.c.l.b16 %v104
    %v814 = vunpack.c.h.b16 %v104
    %v815 = vunpack.c.l.b16 %v105
    %v816 = vunpack.c.h.b16 %v105
    %v817 = vunpack.c.l.b16 %v106
    %v818 = vunpack.c.h.b16 %v106
    %v819 = vunpack.c.l.b16 %v107
    %v820 = vunpack.c.h.b16 %v107
    %v821 = vunpack.c.l.b16 %v108
    %v822 = vunpack.c.h.b16 %v108
    %v823 = vunpack.c.l.b16 %v109
    %v824 = vunpack.c.h.b16 %v109
    %v825 = vunpack.c.l.b16 %v110
    %v826 = vunpack.c.h.b16 %v110
    %v827 = vunpack.c.l.b16 %v111
    %v828 = vunpack.c.h.b16 %v111
    %v829 = vunpack.c.l.b16 %v112
    %v830 = vunpack.c.h.b16 %v112
    %v831 = vunpack.c.l.b16 %v113
    %v832 = vunpack.c.h.b16 %v113
    %v833 = vunpack.c.l.b16 %v114
    %v834 = vunpack.c.h.b16 %v114
    %v835 = vunpack.c.l.b16 %v115
    %v836 = vunpack.c.h.b16 %v115
    %v837 = vunpack.c.l.b16 %v116
    %v838 = vunpack.c.h.b16 %v116
    %v839 = vunpack.c.l.b16 %v117
    %v840 = vunpack.c.h.b16 %v117
    %v841 = vunpack.c.l.b16 %v118
    %v842 = vunpack.c.h.b16 %v118
    %v843 = vunpack.c.l.b16 %v119
    %v844 = vunpack.c.h.b16 %v119
    %v845 = vunpack.c.l.b16 %v120
    %v846 = vunpack.c.h.b16 %v120
    %v847 = vunpack.c.l.b16 %v121
    %v848 = vunpack.c.h.b16 %v121
    %v849 = vunpack.c.l.b16 %v122
    %v850 = vunpack.c.h.b16 %v122
    %v851 = vunpack.c.l.b16 %v123
    %v852 = vunpack.c.h.b16 %v123
    %v853 = vunpack.c.l.b16 %v124
    %v854 = vunpack.c.h.b16 %v124
    %v855 = vunpack.c.l.b16 %v125
    %v856 = vunpack.c.h.b16 %v125
    %v857 = vunpack.c.l.b16 %v126
    %v858 = vunpack.c.h.b16 %v126
    %v859 = vunpack.c.l.b16 %v127
    %v860 = vunpack.c.h.b16 %v127
    %v861 = vunpack.c.l.b16 %v128
    %v862 = vunpack.c.h.b16 %v128
    %v863 = vunpack.c.l.b16 %v129
    %v864 = vunpack.c.h.b16 %v129
    %v865 = vunpack.c.l.b16 %v130
    %v866 = vunpack.c.h.b16 %v130
    %v867 = vunpack.c.l.b16 %v131
    %v868 = vunpack.c.h.b16 %v131
    %v869 = vunpack.c.l.b16 %v132
    %v870 = vunpack.c.h.b16 %v132
    %v871 = vunpack.c.l.b16 %v133
    %v872 = vunpack.c.h.b16 %v133
    %v873 = vunpack.c.l.b16 %v134
    %v874 = vunpack.c.h.b16 %v134
    %v875 = vunpack.c.l.b16 %v135
    %v876 = vunpack.c.h.b16 %v135
    %v877 = vunpack.c.l.b16 %v136
    %v878 = vunpack.c.h.b16 %v136
    %v879 = vunpack.c.l.b16 %v137
    %v880 = vunpack.c.h.b16 %v137
    %v881 = vunpack.c.l.b16 %v138
    %v882 = vunpack.c.h.b16 %v138
    %v883 = vunpack.c.l.b16 %v139
    %v884 = vunpack.c.h.b16 %v139
    %v885 = vunpack.c.l.b16 %v140
    %v886 = vunpack.c.h.b16 %v140
    %v887 = vunpack.c.l.b16 %v141
    %v888 = vunpack.c.h.b16 %v141
    %v889 = vunpack.c.l.b16 %v142
    %v890 = vunpack.c.h.b16 %v142
    %v891 = vunpack.c.l.b16 %v143
    %v892 = vunpack.c.h.b16 %v143
    %v893 = vunpack.c.l.b16 %v144
    %v894 = vunpack.c.h.b16 %v144
    %v895 = vunpack.c.l.b16 %v145
    %v896 = vunpack.c.h.b16 %v145
    %v897 = vunpack.c.l.b16 %v146
    %v898 = vunpack.c.h.b16 %v146
    %v899 = vunpack.c.l.b16 %v147
    %v900 = vunpack.c.h.b16 %v147
    %v901 = vunpack.c.l.b16 %v148
    %v902 = vunpack.c.h.b16 %v148
    %v903 = vunpack.c.l.b16 %v149
    %v904 = vunpack.c.h.b16 %v149
    %v905 = vunpack.c.l.b16 %v150
    %v906 = vunpack.c.h.b16 %v150
    %v907 = vunpack.c.l.b16 %v151
    %v908 = vunpack.c.h.b16 %v151
    %v909 = vunpack.c.l.b16 %v152
    %v910 = vunpack.c.h.b16 %v152
    %v911 = vunpack.c.l.b16 %v153
    %v912 = vunpack.c.h.b16 %v153
    %v913 = vunpack.c.l.b16 %v154
    %v914 = vunpack.c.h.b16 %v154
    %v915 = vunpack.c.l.b16 %v155
    %v916 = vunpack.c.h.b16 %v155
    %v917 = vunpack.c.l.b16 %v156
    %v918 = vunpack.c.h.b16 %v156
    %v919 = vunpack.c.l.b16 %v157
    %v920 = vunpack.c.h.b16 %v157
    %v921 = vunpack.c.l.b16 %v158
    %v922 = vunpack.c.h.b16 %v158
    %v923 = vunpack.c.l.b16 %v159
    %v924 = vunpack.c.h.b16 %v159
    %v925 = vunpack.c.l.b16 %v160
    %v926 = vunpack.c.h.b16 %v160
    %v927 = vunpack.c.l.b16 %v161
    %v928 = vunpack.c.h.b16 %v161
    %v929 = vunpack.c.l.b16 %v162
    %v930 = vunpack.c.h.b16 %v162
    %v931 = vunpack.c.l.b16 %v163
    %v932 = vunpack.c.h.b16 %v163
    %v933 = vunpack.c.l.b16 %v164
    %v934 = vunpack.c.h.b16 %v164
    %v935 = vunpack.c.l.b16 %v165
    %v936 = vunpack.c.h.b16 %v165
    %v937 = vunpack.c.l.b16 %v166
    %v938 = vunpack.c.h.b16 %v166
    %v939 = vunpack.c.l.b16 %v167
    %v940 = vunpack.c.h.b16 %v167
    %v941 = vunpack.c.l.b16 %v168
    %v942 = vunpack.c.h.b16 %v168
    %v943 = vunpack.c.l.b16 %v169
    %v944 = vunpack.c.h.b16 %v169
    %v945 = vunpack.c.l.b16 %v170
    %v946 = vunpack.c.h.b16 %v170
    %v947 = vunpack.c.l.b16 %v171
    %v948 = vunpack.c.h.b16 %v171
    %v949 = vunpack.c.l.b16 %v172
    %v950 = vunpack.c.h.b16 %v172
    %v951 = vunpack.c.l.b16 %v173
    %v952 = vunpack.c.h.b16 %v173
    %v953 = vunpack.c.l.b16 %v174
    %v954 = vunpack.c.h.b16 %v174
    %v955 = vunpack.c.l.b16 %v175
    %v956 = vunpack.c.h.b16 %v175
    %v957 = vunpack.c.l.b16 %v176
    %v958 = vunpack.c.h.b16 %v176
    %v959 = vunpack.c.l.b16 %v177
    %v960 = vunpack.c.h.b16 %v177
    %v961 = vunpack.c.l.b16 %v178
    %v962 = vunpack.c.h.b16 %v178
    %v963 = vunpack.c.l.b16 %v179
    %v964 = vunpack.c.h.b16 %v179
    %v965 = vunpack.c.l.b16 %v180
    %v966 = vunpack.c.h.b16 %v180
    %v967 = vunpack.c.l.b16 %v181
    %v968 = vunpack.c.h.b16 %v181
    %v969 = vunpack.c.l.b16 %v182
    %v970 = vunpack.c.h.b16 %v182
    %v971 = vunpack.c.l.b16 %v183
    %v972 = vunpack.c.h.b16 %v183
    %v973 = vunpack.c.l.b16 %v184
    %v974 = vunpack.c.h.b16 %v184
    %v975 = vunpack.c.l.b16 %v185
    %v976 = vunpack.c.h.b16 %v185
    %v977 = vunpack.c.l.b16 %v186
    %v978 = vunpack.c.h.b16 %v186
    %v979 = vunpack.c.l.b16 %v187
    %v980 = vunpack.c.h.b16 %v187
    %v981 = vunpack.c.l.b16 %v188
    %v982 = vunpack.c.h.b16 %v188
    %v983 = vunpack.c.l.b16 %v189
    %v984 = vunpack.c.h.b16 %v189
    %v985 = vunpack.c.l.b16 %v190
    %v986 = vunpack.c.h.b16 %v190
    %v987 = vunpack.c.l.b16 %v191
    %v988 = vunpack.c.h.b16 %v191
    %v989 = vunpack.c.l.b16 %v192
    %v990 = vunpack.c.h.b16 %v192
    %v991 = vunpack.c.l.b16 %v193
    %v992 = vunpack.c.h.b16 %v193
    %v993 = vunpack.c.l.b16 %v194
    %v994 = vunpack.c.h.b16 %v194
    %v995 = vunpack.c.l.b16 %v195
    %v996 = vunpack.c.h.b16 %v195
    %v997 = vunpack.c.l.b16 %v196
    %v998 = vunpack.c.h.b16 %v196
    %v999 = vunpack.c.l.b16 %v197
    %v1000 = vunpack.c.h.b16 %v197
    %v1001 = vunpack.c.l.b16 %v198
    %v1002 = vunpack.c.h.b16 %v198
    %v1003 = vunpack.c.l.b16 %v199
    %v1004 = vunpack.c.h.b16 %v199
    %v1005 = vunpack.c.l.b16 %v200
    %v1006 = vunpack.c.h.b16 %v200
    %v1007 = vunpack.c.l.b16 %v201
    %v1008 = vunpack.c.h.b16 %v201
    %v1009 = vunpack.c.l.b16 %v202
    %v1010 = vunpack.c.h.b16 %v202
    %v1011 = vunpack.c.l.b16 %v203
    %v1012 = vunpack.c.h.b16 %v203
    %v1013 = vunpack.c.l.b16 %v204
    %v1014 = vunpack.c.h.b16 %v204
    %v1015 = vunpack.c.l.b16 %v205
    %v1016 = vunpack.c.h.b16 %v205
    %v1017 = vunpack.c.l.b16 %v206
    %v1018 = vunpack.c.h.b16 %v206
    %v1019 = vunpack.c.l.b16 %v207
    %v1020 = vunpack.c.h.b16 %v207
    %v1021 = vunpack.c.l.b16 %v208
    %v1022 = vunpack.c.h.b16 %v208
    %v1023 = vunpack.c.l.b16 %v209
    %v1024 = vunpack.c.h.b16 %v209
    %v1025 = vunpack.c.l.b16 %v210
    %v1026 = vunpack.c.h.b16 %v210
    %v1027 = vunpack.c.l.b16 %v211
    %v1028 = vunpack.c.h.b16 %v211
    %v1029 = vunpack.c.l.b16 %v212
    %v1030 = vunpack.c.h.b16 %v212
    %v1031 = vunpack.c.l.b16 %v213
    %v1032 = vunpack.c.h.b16 %v213
    %v1033 = vunpack.c.l.b16 %v214
    %v1034 = vunpack.c.h.b16 %v214
    %v1035 = vunpack.c.l.b16 %v215
    %v1036 = vunpack.c.h.b16 %v215
    %v1037 = vunpack.c.l.b16 %v216
    %v1038 = vunpack.c.h.b16 %v216
    %v1039 = vunpack.c.l.b16 %v217
    %v1040 = vunpack.c.h.b16 %v217
    %v1041 = vunpack.c.l.b16 %v218
    %v1042 = vunpack.c.h.b16 %v218
    %v1043 = vunpack.c.l.b16 %v219
    %v1044 = vunpack.c.h.b16 %v219
    %v1045 = vunpack.c.l.b16 %v220
    %v1046 = vunpack.c.h.b16 %v220
    %v1047 = vunpack.c.l.b16 %v221
    %v1048 = vunpack.c.h.b16 %v221
    %v1049 = vunpack.c.l.b16 %v222
    %v1050 = vunpack.c.h.b16 %v222
    %v1051 = vunpack.c.l.b16 %v223
    %v1052 = vunpack.c.h.b16 %v223
    %v1053 = vunpack.c.l.b16 %v224
    %v1054 = vunpack.c.h.b16 %v224
    %v1055 = vunpack.c.l.b16 %v225
    %v1056 = vunpack.c.h.b16 %v225
    %v1057 = vunpack.c.l.b16 %v226
    %v1058 = vunpack.c.h.b16 %v226
    %v1059 = vunpack.c.l.b16 %v227
    %v1060 = vunpack.c.h.b16 %v227
    %v1061 = vunpack.c.l.b16 %v228
    %v1062 = vunpack.c.h.b16 %v228
    %v1063 = vunpack.c.l.b16 %v229
    %v1064 = vunpack.c.h.b16 %v229
    %v1065 = vunpack.c.l.b16 %v230
    %v1066 = vunpack.c.h.b16 %v230
    %v1067 = vunpack.c.l.b16 %v231
    %v1068 = vunpack.c.h.b16 %v231
    %v1069 = vunpack.c.l.b16 %v232
    %v1070 = vunpack.c.h.b16 %v232
    %v1071 = vunpack.c.l.b16 %v233
    %v1072 = vunpack.c.h.b16 %v233
    %v1073 = vunpack.c.l.b16 %v234
    %v1074 = vunpack.c.h.b16 %v234
    %v1075 = vunpack.c.l.b16 %v235
    %v1076 = vunpack.c.h.b16 %v235
    %v1077 = vunpack.c.l.b16 %v236
    %v1078 = vunpack.c.h.b16 %v236
    %v1079 = vunpack.c.l.b16 %v237
    %v1080 = vunpack.c.h.b16 %v237
    %v1081 = vunpack.c.l.b16 %v238
    %v1082 = vunpack.c.h.b16 %v238
    %v1083 = vunpack.c.l.b16 %v239
    %v1084 = vunpack.c.h.b16 %v239
    %v1085 = vunpack.c.l.b16 %v240
    %v1086 = vunpack.c.h.b16 %v240
    %v1087 = vunpack.c.l.b16 %v241
    %v1088 = vunpack.c.h.b16 %v241
    %v1089 = vunpack.c.l.b16 %v242
    %v1090 = vunpack.c.h.b16 %v242
    %v1091 = vunpack.c.l.b16 %v243
    %v1092 = vunpack.c.h.b16 %v243
    %v1093 = vunpack.c.l.b16 %v244
    %v1094 = vunpack.c.h.b16 %v244
    %v1095 = vunpack.c.l.b16 %v245
    %v1096 = vunpack.c.h.b16 %v245
    %v1097 = vunpack.c.l.b16 %v246
    %v1098 = vunpack.c.h.b16 %v246
    %v1099 = vunpack.c.l.b16 %v247
    %v1100 = vunpack.c.h.b16 %v247
    %v1101 = vunpack.c.l.b16 %v248
    %v1102 = vunpack.c.h.b16 %v248
    %v1103 = vunpack.c.l.b16 %v249
    %v1104 = vunpack.c.h.b16 %v249
    %v1105 = vunpack.c.l.b16 %v250
    %v1106 = vunpack.c.h.b16 %v250
    %v1107 = vunpack.c.l.b16 %v251
    %v1108 = vunpack.c.h.b16 %v251
    %v1109 = vunpack.c.l.b16 %v252
    %v1110 = vunpack.c.h.b16 %v252
    %v1111 = vunpack.c.l.b16 %v253
    %v1112 = vunpack.c.h.b16 %v253
    %v1113 = vunpack.c.l.b16 %v254
    %v1114 = vunpack.c.h.b16 %v254
    %v1115 = vunpack.c.l.b16 %v255
    %v1116 = vunpack.c.h.b16 %v255
    %v1117 = vunpack.c.l.b16 %v256
    %v1118 = vunpack.c.h.b16 %v256
    %v1119 = vunpack.c.l.b16 %v257
    %v1120 = vunpack.c.h.b16 %v257
    %v1121 = vunpack.c.l.b16 %v258
    %v1122 = vunpack.c.h.b16 %v258
    %v1123 = vunpack.c.l.b16 %v259
    %v1124 = vunpack.c.h.b16 %v259
    %v1125 = vunpack.c.l.b16 %v260
    %v1126 = vunpack.c.h.b16 %v260
    %v1127 = vunpack.c.l.b16 %v261
    %v1128 = vunpack.c.h.b16 %v261
    %v1129 = vunpack.c.l.b16 %v262
    %v1130 = vunpack.c.h.b16 %v262
    %v1131 = vunpack.c.l.b16 %v263
    %v1132 = vunpack.c.h.b16 %v263
    %v1133 = vunpack.c.l.b16 %v264
    %v1134 = vunpack.c.h.b16 %v264
    %v1135 = vunpack.c.l.b16 %v265
    %v1136 = vunpack.c.h.b16 %v265
    %v1137 = vunpack.c.l.b16 %v266
    %v1138 = vunpack.c.h.b16 %v266
    %v1139 = vunpack.c.l.b16 %v267
    %v1140 = vunpack.c.h.b16 %v267
    %v1141 = vunpack.c.l.b16 %v268
    %v1142 = vunpack.c.h.b16 %v268
    %v1143 = vunpack.c.l.b16 %v269
    %v1144 = vunpack.c.h.b16 %v269
    %v1145 = vunpack.c.l.b16 %v270
    %v1146 = vunpack.c.h.b16 %v270
    %v1147 = vunpack.c.l.b16 %v271
    %v1148 = vunpack.c.h.b16 %v271
    %v1149 = vunpack.c.l.b16 %v272
    %v1150 = vunpack.c.h.b16 %v272
    %v1151 = vunpack.c.l.b16 %v273
    %v1152 = vunpack.c.h.b16 %v273
    %v1153 = vunpack.c.l.b16 %v274
    %v1154 = vunpack.c.h.b16 %v274
    %v1155 = vunpack.c.l.b16 %v275
    %v1156 = vunpack.c.h.b16 %v275
    %v1157 = vunpack.c.l.b16 %v276
    %v1158 = vunpack.c.h.b16 %v276
    %v1159 = vunpack.c.l.b16 %v277
    %v1160 = vunpack.c.h.b16 %v277
    %v1161 = vunpack.c.l.b16 %v278
    %v1162 = vunpack.c.h.b16 %v278
    %v1163 = vunpack.c.l.b16 %v279
    %v1164 = vunpack.c.h.b16 %v279
    %v1165 = vunpack.c.l.b16 %v280
    %v1166 = vunpack.c.h.b16 %v280
    %v1167 = vunpack.c.l.b16 %v281
    %v1168 = vunpack.c.h.b16 %v281
    %v1169 = vunpack.c.l.b16 %v282
    %v1170 = vunpack.c.h.b16 %v282
    %v1171 = vunpack.c.l.b16 %v283
    %v1172 = vunpack.c.h.b16 %v283
    %v1173 = vunpack.c.l.b16 %v284
    %v1174 = vunpack.c.h.b16 %v284
    %v1175 = vunpack.c.l.b16 %v285
    %v1176 = vunpack.c.h.b16 %v285
    %v1177 = vunpack.c.l.b16 %v286
    %v1178 = vunpack.c.h.b16 %v286
    %v1179 = vunpack.c.l.b16 %v287
    %v1180 = vunpack.c.h.b16 %v287
    %v1181 = vunpack.c.l.b16 %v288
    %v1182 = vunpack.c.h.b16 %v288
    %v1183 = vunpack.c.l.b16 %v289
    %v1184 = vunpack.c.h.b16 %v289
    %v1185 = vunpack.c.l.b16 %v290
    %v1186 = vunpack.c.h.b16 %v290
    %v1187 = vunpack.c.l.b16 %v291
    %v1188 = vunpack.c.h.b16 %v291
    %v1189 = vunpack.c.l.b16 %v292
    %v1190 = vunpack.c.h.b16 %v292
    %v1191 = vunpack.c.l.b16 %v293
    %v1192 = vunpack.c.h.b16 %v293
    %v1193 = vunpack.c.l.b16 %v294
    %v1194 = vunpack.c.h.b16 %v294
    %v1195 = vunpack.c.l.b16 %v295
    %v1196 = vunpack.c.h.b16 %v295
    %v1197 = vunpack.c.l.b16 %v296
    %v1198 = vunpack.c.h.b16 %v296
    %v1199 = vunpack.c.l.b16 %v297
    %v1200 = vunpack.c.h.b16 %v297
    %v1201 = vunpack.c.l.b16 %v298
    %v1202 = vunpack.c.h.b16 %v298
    %v1203 = vunpack.c.l.b16 %v299
    %v1204 = vunpack.c.h.b16 %v299
    %v1205 = vunpack.c.l.b16 %v300
    %v1206 = vunpack.c.h.b16 %v300
    %v1207 = vunpack.c.l.b16 %v301
    %v1208 = vunpack.c.h.b16 %v301
    %v1209 = vunpack.c.l.b16 %v302
    %v1210 = vunpack.c.h.b16 %v302
    %v1211 = vunpack.c.l.b16 %v303
    %v1212 = vunpack.c.h.b16 %v303
    %v1213 = vunpack.c.l.b16 %v304
    %v1214 = vunpack.c.h.b16 %v304
    %v1215 = vunpack.c.l.b16 %v305
    %v1216 = vunpack.c.h.b16 %v305
    %v1217 = vunpack.c.l.b16 %v306
    %v1218 = vunpack.c.h.b16 %v306
    %v1219 = vunpack.c.l.b16 %v307
    %v1220 = vunpack.c.h.b16 %v307
    %v1221 = vunpack.c.l.b16 %v308
    %v1222 = vunpack.c.h.b16 %v308
    %v1223 = vunpack.c.l.b16 %v309
    %v1224 = vunpack.c.h.b16 %v309
    %v1225 = vunpack.c.l.b16 %v310
    %v1226 = vunpack.c.h.b16 %v310
    %v1227 = vunpack.c.l.b16 %v311
    %v1228 = vunpack.c.h.b16 %v311
    %v1229 = vunpack.c.l.b16 %v312
    %v1230 = vunpack.c.h.b16 %v312
    %v1231 = vunpack.c.l.b16 %v313
    %v1232 = vunpack.c.h.b16 %v313
    %v1233 = vunpack.c.l.b16 %v314
    %v1234 = vunpack.c.h.b16 %v314
    %v1235 = vunpack.c.l.b16 %v315
    %v1236 = vunpack.c.h.b16 %v315
    %v1237 = vunpack.c.l.b16 %v316
    %v1238 = vunpack.c.h.b16 %v316
    %v1239 = vunpack.c.l.b16 %v317
    %v1240 = vunpack.c.h.b16 %v317
    %v1241 = vunpack.c.l.b16 %v318
    %v1242 = vunpack.c.h.b16 %v318
    %v1243 = vunpack.c.l.b16 %v319
    %v1244 = vunpack.c.h.b16 %v319
    %v1245 = vunpack.c.l.b16 %v320
    %v1246 = vunpack.c.h.b16 %v320
    %v1247 = vunpack.c.l.b16 %v321
    %v1248 = vunpack.c.h.b16 %v321
    %v1249 = vpack.c.b16 %v675, %v673
    %v1250 = vpack.c.b16 %v676, %v674
    %v1251 = vpack.c.b16 %v679, %v677
    %v1252 = vpack.c.b16 %v680, %v678
    %v1253 = vpack.c.b16 %v683, %v681
    %v1254 = vpack.c.b16 %v684, %v682
    %v1255 = vpack.c.b16 %v687, %v685
    %v1256 = vpack.c.b16 %v688, %v686
    %v1257 = vpack.c.b16 %v691, %v689
    %v1258 = vpack.c.b16 %v692, %v690
    %v1259 = vpack.c.b16 %v695, %v693
    %v1260 = vpack.c.b16 %v696, %v694
    %v1261 = vpack.c.b16 %v699, %v697
    %v1262 = vpack.c.b16 %v700, %v698
    %v1263 = vpack.c.b16 %v703, %v701
    %v1264 = vpack.c.b16 %v704, %v702
    %v1265 = vpack.c.b16 %v707, %v705
    %v1266 = vpack.c.b16 %v708, %v706
    %v1267 = vpack.c.b16 %v711, %v709
    %v1268 = vpack.c.b16 %v712, %v710
    %v1269 = vpack.c.b16 %v715, %v713
    %v1270 = vpack.c.b16 %v716, %v714
    %v1271 = vpack.c.b16 %v719, %v717
    %v1272 = vpack.c.b16 %v720, %v718
    %v1273 = vpack.c.b16 %v723, %v721
    %v1274 = vpack.c.b16 %v724, %v722
    %v1275 = vpack.c.b16 %v727, %v725
    %v1276 = vpack.c.b16 %v728, %v726
    %v1277 = vpack.c.b16 %v731, %v729
    %v1278 = vpack.c.b16 %v732, %v730
    %v1279 = vpack.c.b16 %v735, %v733
    %v1280 = vpack.c.b16 %v736, %v734
    %v1281 = vpack.c.b16 %v739, %v737
    %v1282 = vpack.c.b16 %v740, %v738
    %v1283 = vpack.c.b16 %v743, %v741
    %v1284 = vpack.c.b16 %v744, %v742
    %v1285 = vpack.c.b16 %v747, %v745
    %v1286 = vpack.c.b16 %v748, %v746
    %v1287 = vpack.c.b16 %v751, %v749
    %v1288 = vpack.c.b16 %v752, %v750
    %v1289 = vpack.c.b16 %v755, %v753
    %v1290 = vpack.c.b16 %v756, %v754
    %v1291 = vpack.c.b16 %v759, %v757
    %v1292 = vpack.c.b16 %v760, %v758
    %v1293 = vpack.c.b16 %v763, %v761
    %v1294 = vpack.c.b16 %v764, %v762
    %v1295 = vpack.c.b16 %v767, %v765
    %v1296 = vpack.c.b16 %v768, %v766
    %v1297 = vpack.c.b16 %v771, %v769
    %v1298 = vpack.c.b16 %v772, %v770
    %v1299 = vpack.c.b16 %v775, %v773
    %v1300 = vpack.c.b16 %v776, %v774
    %v1301 = vpack.c.b16 %v779, %v777
    %v1302 = vpack.c.b16 %v780, %v778
    %v1303 = vpack.c.b16 %v783, %v781
    %v1304 = vpack.c.b16 %v784, %v782
    %v1305 = vpack.c.b16 %v787, %v785
    %v1306 = vpack.c.b16 %v788, %v786
    %v1307 = vpack.c.b16 %v791, %v789
    %v1308 = vpack.c.b16 %v792, %v790
    %v1309 = vpack.c.b16 %v795, %v793
    %v1310 = vpack.c.b16 %v796, %v794
    %v1311 = vpack.c.b16 %v799, %v797
    %v1312 = vpack.c.b16 %v800, %v798
    %v1313 = vpack.c.b16 %v803, %v801
    %v1314 = vpack.c.b16 %v804, %v802
    %v1315 = vpack.c.b16 %v807, %v805
    %v1316 = vpack.c.b16 %v808, %v806
    %v1317 = vpack.c.b16 %v811, %v809
    %v1318 = vpack.c.b16 %v812, %v810
    %v1319 = vpack.c.b16 %v815, %v813
    %v1320 = vpack.c.b16 %v816, %v814
    %v1321 = vpack.c.b16 %v819, %v817
    %v1322 = vpack.c.b16 %v820, %v818
    %v1323 = vpack.c.b16 %v823, %v821
    %v1324 = vpack.c.b16 %v824, %v822
    %v1325 = vpack.c.b16 %v827, %v825
    %v1326 = vpack.c.b16 %v828, %v826
    %v1327 = vpack.c.b16 %v831, %v829
    %v1328 = vpack.c.b16 %v832, %v830
    %v1329 = vpack.c.b16 %v835, %v833
    %v1330 = vpack.c.b16 %v836, %v834
    %v1331 = vpack.c.b16 %v839, %v837
    %v1332 = vpack.c.b16 %v840, %v838
    %v1333 = vpack.c.b16 %v843, %v841
    %v1334 = vpack.c.b16 %v844, %v842
    %v1335 = vpack.c.b16 %v847, %v845
    %v1336 = vpack.c.b16 %v848, %v846
    %v1337 = vpack.c.b16 %v851, %v849
    %v1338 = vpack.c.b16 %v852, %v850
    %v1339 = vpack.c.b16 %v855, %v853
    %v1340 = vpack.c.b16 %v856, %v854
    %v1341 = vpack.c.b16 %v859, %v857
    %v1342 = vpack.c.b16 %v860, %v858
    %v1343 = vpack.c.b16 %v863, %v861
    %v1344 = vpack.c.b16 %v864, %v862
    %v1345 = vpack.c.b16 %v867, %v865
    %v1346 = vpack.c.b16 %v868, %v866
    %v1347 = vpack.c.b16 %v871, %v869
    %v1348 = vpack.c.b16 %v872, %v870
    %v1349 = vpack.c.b16 %v875, %v873
    %v1350 = vpack.c.b16 %v876, %v874
    %v1351 = vpack.c.b16 %v879, %v877
    %v1352 = vpack.c.b16 %v880, %v878
    %v1353 = vpack.c.b16 %v883, %v881
    %v1354 = vpack.c.b16 %v884, %v882
    %v1355 = vpack.c.b16 %v887, %v885
    %v1356 = vpack.c.b16 %v888, %v886
    %v1357 = vpack.c.b16 %v891, %v889
    %v1358 = vpack.c.b16 %v892, %v890
    %v1359 = vpack.c.b16 %v895, %v893
    %v1360 = vpack.c.b16 %v896, %v894
    %v1361 = vpack.c.b16 %v899, %v897
    %v1362 = vpack.c.b16 %v900, %v898
    %v1363 = vpack.c.b16 %v903, %v901
    %v1364 = vpack.c.b16 %v904, %v902
    %v1365 = vpack.c.b16 %v907, %v905
    %v1366 = vpack.c.b16 %v908, %v906
    %v1367 = vpack.c.b16 %v911, %v909
    %v1368 = vpack.c.b16 %v912, %v910
    %v1369 = vpack.c.b16 %v915, %v913
    %v1370 = vpack.c.b16 %v916, %v914
    %v1371 = vpack.c.b16 %v919, %v917
    %v1372 = vpack.c.b16 %v920, %v918
    %v1373 = vpack.c.b16 %v923, %v921
    %v1374 = vpack.c.b16 %v924, %v922
    %v1375 = vpack.c.b16 %v927, %v925
    %v1376 = vpack.c.b16 %v928, %v926
    %v1377 = vpack.c.b16 %v931, %v929
    %v1378 = vpack.c.b16 %v932, %v930
    %v1379 = vpack.c.b16 %v935, %v933
    %v1380 = vpack.c.b16 %v936, %v934
    %v1381 = vpack.c.b16 %v939, %v937
    %v1382 = vpack.c.b16 %v940, %v938
    %v1383 = vpack.c.b16 %v943, %v941
    %v1384 = vpack.c.b16 %v944, %v942
    %v1385 = vpack.c.b16 %v947, %v945
    %v1386 = vpack.c.b16 %v948, %v946
    %v1387 = vpack.c.b16 %v951, %v949
    %v1388 = vpack.c.b16 %v952, %v950
    %v1389 = vpack.c.b16 %v955, %v953
    %v1390 = vpack.c.b16 %v956, %v954
    %v1391 = vpack.c.b16 %v959, %v957
    %v1392 = vpack.c.b16 %v960, %v958
    %v1393 = vpack.c.b16 %v963, %v961
    %v1394 = vpack.c.b16 %v964, %v962
    %v1395 = vpack.c.b16 %v967, %v965
    %v1396 = vpack.c.b16 %v968, %v966
    %v1397 = vpack.c.b16 %v971, %v969
    %v1398 = vpack.c.b16 %v972, %v970
    %v1399 = vpack.c.b16 %v975, %v973
    %v1400 = vpack.c.b16 %v976, %v974
    %v1401 = vpack.c.b16 %v979, %v977
    %v1402 = vpack.c.b16 %v980, %v978
    %v1403 = vpack.c.b16 %v983, %v981
    %v1404 = vpack.c.b16 %v984, %v982
    %v1405 = vpack.c.b16 %v987, %v985
    %v1406 = vpack.c.b16 %v988, %v986
    %v1407 = vpack.c.b16 %v991, %v989
    %v1408 = vpack.c.b16 %v992, %v990
    %v1409 = vpack.c.b16 %v995, %v993
    %v1410 = vpack.c.b16 %v996, %v994
    %v1411 = vpack.c.b16 %v999, %v997
    %v1412 = vpack.c.b16 %v1000, %v998
    %v1413 = vpack.c.b16 %v1003, %v1001
    %v1414 = vpack.c.b16 %v1004, %v1002
    %v1415 = vpack.c.b16 %v1007, %v1005
    %v1416 = vpack.c.b16 %v1008, %v1006
    %v1417 = vpack.c.b16 %v1011, %v1009
    %v1418 = vpack.c.b16 %v1012, %v1010
    %v1419 = vpack.c.b16 %v1015, %v1013
    %v1420 = vpack.c.b16 %v1016, %v1014
    %v1421 = vpack.c.b16 %v1019, %v1017
    %v1422 = vpack.c.b16 %v1020, %v1018
    %v1423 = vpack.c.b16 %v1023, %v1021
    %v1424 = vpack.c.b16 %v1024, %v1022
    %v1425 = vpack.c.b16 %v1027, %v1025
    %v1426 = vpack.c.b16 %v1028, %v1026
    %v1427 = vpack.c.b16 %v1031, %v1029
    %v1428 = vpack.c.b16 %v1032, %v1030
    %v1429 = vpack.c.b16 %v1035, %v1033
    %v1430 = vpack.c.b16 %v1036, %v1034
    %v1431 = vpack.c.b16 %v1039, %v1037
    %v1432 = vpack.c.b16 %v1040, %v1038
    %v1433 = vpack.c.b16 %v1043, %v1041
    %v1434 = vpack.c.b16 %v1044, %v1042
    %v1435 = vpack.c.b16 %v1047, %v1045
    %v1436 = vpack.c.b16 %v1048, %v1046
    %v1437 = vpack.c.b16 %v1051, %v1049
    %v1438 = vpack.c.b16 %v1052, %v1050
    %v1439 = vpack.c.b16 %v1055, %v1053
    %v1440 = vpack.c.b16 %v1056, %v1054
    %v1441 = vpack.c.b16 %v1059, %v1057
    %v1442 = vpack.c.b16 %v1060, %v1058
    %v1443 = vpack.c.b16 %v1063, %v1061
    %v1444 = vpack.c.b16 %v1064, %v1062
    %v1445 = vpack.c.b16 %v1067, %v1065
    %v1446 = vpack.c.b16 %v1068, %v1066
    %v1447 = vpack.c.b16 %v1071, %v1069
    %v1448 = vpack.c.b16 %v1072, %v1070
    %v1449 = vpack.c.b16 %v1075, %v1073
    %v1450 = vpack.c.b16 %v1076, %v1074
    %v1451 = vpack.c.b16 %v1079, %v1077
    %v1452 = vpack.c.b16 %v1080, %v1078
    %v1453 = vpack.c.b16 %v1083, %v1081
    %v1454 = vpack.c.b16 %v1084, %v1082
    %v1455 = vpack.c.b16 %v1087, %v1085
    %v1456 = vpack.c.b16 %v1088, %v1086
    %v1457 = vpack.c.b16 %v1091, %v1089
    %v1458 = vpack.c.b16 %v1092, %v1090
    %v1459 = vpack.c.b16 %v1095, %v1093
    %v1460 = vpack.c.b16 %v1096, %v1094
    %v1461 = vpack.c.b16 %v1099, %v1097
    %v1462 = vpack.c.b16 %v1100, %v1098
    %v1463 = vpack.c.b16 %v1103, %v1101
    %v1464 = vpack.c.b16 %v1104, %v1102
    %v1465 = vpack.c.b16 %v1107, %v1105
    %v1466 = vpack.c.b16 %v1108, %v1106
    %v1467 = vpack.c.b16 %v1111, %v1109
    %v1468 = vpack.c.b16 %v1112, %v1110
    %v1469 = vpack.c.b16 %v1115, %v1113
    %v1470 = vpack.c.b16 %v1116, %v1114
    %v1471 = vpack.c.b16 %v1119, %v1117
    %v1472 = vpack.c.b16 %v1120, %v1118
    %v1473 = vpack.c.b16 %v1123, %v1121
    %v1474 = vpack.c.b16 %v1124, %v1122
    %v1475 = vpack.c.b16 %v1127, %v1125
    %v1476 = vpack.c.b16 %v1128, %v1126
    %v1477 = vpack.c.b16 %v1131, %v1129
    %v1478 = vpack.c.b16 %v1132, %v1130
    %v1479 = vpack.c.b16 %v1135, %v1133
    %v1480 = vpack.c.b16 %v1136, %v1134
    %v1481 = vpack.c.b16 %v1139, %v1137
    %v1482 = vpack.c.b16 %v1140, %v1138
    %v1483 = vpack.c.b16 %v1143, %v1141
    %v1484 = vpack.c.b16 %v1144, %v1142
    %v1485 = vpack.c.b16 %v1147, %v1145
    %v1486 = vpack.c.b16 %v1148, %v1146
    %v1487 = vpack.c.b16 %v1151, %v1149
    %v1488 = vpack.c.b16 %v1152, %v1150
    %v1489 = vpack.c.b16 %v1155, %v1153
    %v1490 = vpack.c.b16 %v1156, %v1154
    %v1491 = vpack.c.b16 %v1159, %v1157
    %v1492 = vpack.c.b16 %v1160, %v1158
    %v1493 = vpack.c.b16 %v1163, %v1161
    %v1494 = vpack.c.b16 %v1164, %v1162
    %v1495 = vpack.c.b16 %v1167, %v1165
    %v1496 = vpack.c.b16 %v1168, %v1166
    %v1497 = vpack.c.b16 %v1171, %v1169
    %v1498 = vpack.c.b16 %v1172, %v1170
    %v1499 = vpack.c.b16 %v1175, %v1173
    %v1500 = vpack.c.b16 %v1176, %v1174
    %v1501 = vpack.c.b16 %v1179, %v1177
    %v1502 = vpack.c.b16 %v1180, %v1178
    %v1503 = vpack.c.b16 %v1183, %v1181
    %v1504 = vpack.c.b16 %v1184, %v1182
    %v1505 = vpack.c.b16 %v1187, %v1185
    %v1506 = vpack.c.b16 %v1188, %v1186
    %v1507 = vpack.c.b16 %v1191, %v1189
    %v1508 = vpack.c.b16 %v1192, %v1190
    %v1509 = vpack.c.b16 %v1195, %v1193
    %v1510 = vpack.c.b16 %v1196, %v1194
    %v1511 = vpack.c.b16 %v1199, %v1197
    %v1512 = vpack.c.b16 %v1200, %v1198
    %v1513 = vpack.c.b16 %v1203, %v1201
    %v1514 = vpack.c.b16 %v1204, %v1202
    %v1515 = vpack.c.b16 %v1207, %v1205
    %v1516 = vpack.c.b16 %v1208, %v1206
    %v1517 = vpack.c.b16 %v1211, %v1209
    %v1518 = vpack.c.b16 %v1212, %v1210
    %v1519 = vpack.c.b16 %v1215, %v1213
    %v1520 = vpack.c.b16 %v1216, %v1214
    %v1521 = vpack.c.b16 %v1219, %v1217
    %v1522 = vpack.c.b16 %v1220, %v1218
    %v1523 = vpack.c.b16 %v1223, %v1221
    %v1524 = vpack.c.b16 %v1224, %v1222
    %v1525 = vpack.c.b16 %v1227, %v1225
    %v1526 = vpack.c.b16 %v1228, %v1226
    %v1527 = vpack.c.b16 %v1231, %v1229
    %v1528 = vpack.c.b16 %v1232, %v1230
    %v1529 = vpack.c.b16 %v1235, %v1233
    %v1530 = vpack.c.b16 %v1236, %v1234
    %v1531 = vpack.c.b16 %v1239, %v1237
    %v1532 = vpack.c.b16 %v1240, %v1238
    %v1533 = vpack.c.b16 %v1243, %v1241
    %v1534 = vpack.c.b16 %v1244, %v1242
    %v1535 = vpack.c.b16 %v1247, %v1245
    %v1536 = vpack.c.b16 %v1248, %v1246
    %1825 = vmatprep.subr.bf16.mxu0 %v1250
    %1826 = vmatpush1.bf16.msra.mxu0 %v1249
    %1827 = vmatprep.subr.bf16.mxu0 %v1252
    %1828 = vmatpush1.bf16.msra.mxu0 %v1251
    %1829 = vmatprep.subr.bf16.mxu0 %v1254
    %1830 = vmatpush1.bf16.msra.mxu0 %v1253
    %1831 = vmatprep.subr.bf16.mxu0 %v1256
    %1832 = vmatpush1.bf16.msra.mxu0 %v1255
    %1833 = vmatprep.subr.bf16.mxu0 %v1258
    %1834 = vmatpush1.bf16.msra.mxu0 %v1257
    %1835 = vmatprep.subr.bf16.mxu0 %v1260
    %1836 = vmatpush1.bf16.msra.mxu0 %v1259
    %1837 = vmatprep.subr.bf16.mxu0 %v1262
    %1838 = vmatpush1.bf16.msra.mxu0 %v1261
    %1839 = vmatprep.subr.bf16.mxu0 %v1264
    %1840 = vmatpush1.bf16.msra.mxu0 %v1263
    %1841 = vmatprep.subr.bf16.mxu0 %v1266
    %1842 = vmatpush1.bf16.msra.mxu0 %v1265
    %1843 = vmatprep.subr.bf16.mxu0 %v1268
    %1844 = vmatpush1.bf16.msra.mxu0 %v1267
    %1845 = vmatprep.subr.bf16.mxu0 %v1270
    %1846 = vmatpush1.bf16.msra.mxu0 %v1269
    %1847 = vmatprep.subr.bf16.mxu0 %v1272
    %1848 = vmatpush1.bf16.msra.mxu0 %v1271
    %1849 = vmatprep.subr.bf16.mxu0 %v1274
    %1850 = vmatpush1.bf16.msra.mxu0 %v1273
    %1851 = vmatprep.subr.bf16.mxu0 %v1276
    %1852 = vmatpush1.bf16.msra.mxu0 %v1275
    %1853 = vmatprep.subr.bf16.mxu0 %v1278
    %1854 = vmatpush1.bf16.msra.mxu0 %v1277
    %1855 = vmatprep.subr.bf16.mxu0 %v1280
    %1856 = vmatpush1.bf16.msra.mxu0 %v1279
    %1857 = vmatprep.mubr.bf16.mxu0 %v350
    %1858 = vmatmul.mubr.bf16.gmra.mrb[0].mxu0 %v349
    %v1859 = vpop.f32.mrb[0].mxu0
    %v1860 = vadd.f32 0.0, %v1859
    %v1861 = vpop.f32.mrb[0].mxu0
    %v1862 = vadd.f32 0.0, %v1861
    %v1863 = vpop.f32.mrb[0].mxu0
    %v1864 = vpop.f32.mrb[0].mxu0
    %1865 = vdwg.mxu0
    %1866 = vmatprep.subr.bf16.mxu0 %v1282
    %1867 = vmatpush1.bf16.msra.mxu0 %v1281
    %1868 = vmatprep.subr.bf16.mxu0 %v1284
    %1869 = vmatpush1.bf16.msra.mxu0 %v1283
    %1870 = vmatprep.subr.bf16.mxu0 %v1286
    %1871 = vmatpush1.bf16.msra.mxu0 %v1285
    %1872 = vmatprep.subr.bf16.mxu0 %v1288
    %1873 = vmatpush1.bf16.msra.mxu0 %v1287
    %1874 = vmatprep.subr.bf16.mxu0 %v1290
    %1875 = vmatpush1.bf16.msra.mxu0 %v1289
    %1876 = vmatprep.subr.bf16.mxu0 %v1292
    %1877 = vmatpush1.bf16.msra.mxu0 %v1291
    %1878 = vmatprep.subr.bf16.mxu0 %v1294
    %1879 = vmatpush1.bf16.msra.mxu0 %v1293
    %1880 = vmatprep.subr.bf16.mxu0 %v1296
    %1881 = vmatpush1.bf16.msra.mxu0 %v1295
    %1882 = vmatprep.subr.bf16.mxu0 %v1298
    %1883 = vmatpush1.bf16.msra.mxu0 %v1297
    %1884 = vmatprep.subr.bf16.mxu0 %v1300
    %1885 = vmatpush1.bf16.msra.mxu0 %v1299
    %1886 = vmatprep.subr.bf16.mxu0 %v1302
    %1887 = vmatpush1.bf16.msra.mxu0 %v1301
    %1888 = vmatprep.subr.bf16.mxu0 %v1304
    %1889 = vmatpush1.bf16.msra.mxu0 %v1303
    %1890 = vmatprep.subr.bf16.mxu0 %v1306
    %1891 = vmatpush1.bf16.msra.mxu0 %v1305
    %1892 = vmatprep.subr.bf16.mxu0 %v1308
    %1893 = vmatpush1.bf16.msra.mxu0 %v1307
    %1894 = vmatprep.subr.bf16.mxu0 %v1310
    %1895 = vmatpush1.bf16.msra.mxu0 %v1309
    %1896 = vmatprep.subr.bf16.mxu0 %v1312
    %1897 = vmatpush1.bf16.msra.mxu0 %v1311
    %1898 = vmatprep.mubr.bf16.mxu0 %v352
    %1899 = vmatmul.mubr.bf16.gmra.mrb[0].mxu0 %v351
    %v1900 = vpop.f32.mrb[0].mxu0
    %v1901 = vadd.f32 %v1860, %v1900
    %v1902 = vpop.f32.mrb[0].mxu0
    %v1903 = vadd.f32 %v1862, %v1902
    %v1904 = vpop.f32.mrb[0].mxu0
    %v1905 = vpop.f32.mrb[0].mxu0
    %1906 = vdwg.mxu0
    %1907 = vmatprep.subr.bf16.mxu0 %v1314
    %1908 = vmatpush1.bf16.msra.mxu0 %v1313
    %1909 = vmatprep.subr.bf16.mxu0 %v1316
    %1910 = vmatpush1.bf16.msra.mxu0 %v1315
    %1911 = vmatprep.subr.bf16.mxu0 %v1318
    %1912 = vmatpush1.bf16.msra.mxu0 %v1317
    %1913 = vmatprep.subr.bf16.mxu0 %v1320
    %1914 = vmatpush1.bf16.msra.mxu0 %v1319
    %1915 = vmatprep.subr.bf16.mxu0 %v1322
    %1916 = vmatpush1.bf16.msra.mxu0 %v1321
    %1917 = vmatprep.subr.bf16.mxu0 %v1324
    %1918 = vmatpush1.bf16.msra.mxu0 %v1323
    %1919 = vmatprep.subr.bf16.mxu0 %v1326
    %1920 = vmatpush1.bf16.msra.mxu0 %v1325
    %1921 = vmatprep.subr.bf16.mxu0 %v1328
    %1922 = vmatpush1.bf16.msra.mxu0 %v1327
    %1923 = vmatprep.subr.bf16.mxu0 %v1330
    %1924 = vmatpush1.bf16.msra.mxu0 %v1329
    %1925 = vmatprep.subr.bf16.mxu0 %v1332
    %1926 = vmatpush1.bf16.msra.mxu0 %v1331
    %1927 = vmatprep.subr.bf16.mxu0 %v1334
    %1928 = vmatpush1.bf16.msra.mxu0 %v1333
    %1929 = vmatprep.subr.bf16.mxu0 %v1336
    %1930 = vmatpush1.bf16.msra.mxu0 %v1335
    %1931 = vmatprep.subr.bf16.mxu0 %v1338
    %1932 = vmatpush1.bf16.msra.mxu0 %v1337
    %1933 = vmatprep.subr.bf16.mxu0 %v1340
    %1934 = vmatpush1.bf16.msra.mxu0 %v1339
    %1935 = vmatprep.subr.bf16.mxu0 %v1342
    %1936 = vmatpush1.bf16.msra.mxu0 %v1341
    %1937 = vmatprep.subr.bf16.mxu0 %v1344
    %1938 = vmatpush1.bf16.msra.mxu0 %v1343
    %1939 = vmatprep.mubr.bf16.mxu0 %v354
    %1940 = vmatmul.mubr.bf16.gmra.mrb[0].mxu0 %v353
    %v1941 = vpop.f32.mrb[0].mxu0
    %v1942 = vadd.f32 %v1901, %v1941
    %v1943 = vpop.f32.mrb[0].mxu0
    %v1944 = vadd.f32 %v1903, %v1943
    %v1945 = vpop.f32.mrb[0].mxu0
    %v1946 = vpop.f32.mrb[0].mxu0
    %1947 = vdwg.mxu0
    %1948 = vmatprep.subr.bf16.mxu0 %v1346
    %1949 = vmatpush1.bf16.msra.mxu0 %v1345
    %1950 = vmatprep.subr.bf16.mxu0 %v1348
    %1951 = vmatpush1.bf16.msra.mxu0 %v1347
    %1952 = vmatprep.subr.bf16.mxu0 %v1350
    %1953 = vmatpush1.bf16.msra.mxu0 %v1349
    %1954 = vmatprep.subr.bf16.mxu0 %v1352
    %1955 = vmatpush1.bf16.msra.mxu0 %v1351
    %1956 = vmatprep.subr.bf16.mxu0 %v1354
    %1957 = vmatpush1.bf16.msra.mxu0 %v1353
    %1958 = vmatprep.subr.bf16.mxu0 %v1356
    %1959 = vmatpush1.bf16.msra.mxu0 %v1355
    %1960 = vmatprep.subr.bf16.mxu0 %v1358
    %1961 = vmatpush1.bf16.msra.mxu0 %v1357
    %1962 = vmatprep.subr.bf16.mxu0 %v1360
    %1963 = vmatpush1.bf16.msra.mxu0 %v1359
    %1964 = vmatprep.subr.bf16.mxu0 %v1362
    %1965 = vmatpush1.bf16.msra.mxu0 %v1361
    %1966 = vmatprep.subr.bf16.mxu0 %v1364
    %1967 = vmatpush1.bf16.msra.mxu0 %v1363
    %1968 = vmatprep.subr.bf16.mxu0 %v1366
    %1969 = vmatpush1.bf16.msra.mxu0 %v1365
    %1970 = vmatprep.subr.bf16.mxu0 %v1368
    %1971 = vmatpush1.bf16.msra.mxu0 %v1367
    %1972 = vmatprep.subr.bf16.mxu0 %v1370
    %1973 = vmatpush1.bf16.msra.mxu0 %v1369
    %1974 = vmatprep.subr.bf16.mxu0 %v1372
    %1975 = vmatpush1.bf16.msra.mxu0 %v1371
    %1976 = vmatprep.subr.bf16.mxu0 %v1374
    %1977 = vmatpush1.bf16.msra.mxu0 %v1373
    %1978 = vmatprep.subr.bf16.mxu0 %v1376
    %1979 = vmatpush1.bf16.msra.mxu0 %v1375
    %1980 = vmatprep.mubr.bf16.mxu0 %v356
    %1981 = vmatmul.mubr.bf16.gmra.mrb[0].mxu0 %v355
    %v1982 = vpop.f32.mrb[0].mxu0
    %v1983 = vadd.f32 %v1942, %v1982
    %v1984 = vpop.f32.mrb[0].mxu0
    %v1985 = vadd.f32 %v1944, %v1984
    %v1986 = vpop.f32.mrb[0].mxu0
    %v1987 = vpop.f32.mrb[0].mxu0
    %1988 = vdwg.mxu0
    %1989 = vmatprep.subr.bf16.mxu0 %v1378
    %1990 = vmatpush1.bf16.msra.mxu0 %v1377
    %1991 = vmatprep.subr.bf16.mxu0 %v1380
    %1992 = vmatpush1.bf16.msra.mxu0 %v1379
    %1993 = vmatprep.subr.bf16.mxu0 %v1382
    %1994 = vmatpush1.bf16.msra.mxu0 %v1381
    %1995 = vmatprep.subr.bf16.mxu0 %v1384
    %1996 = vmatpush1.bf16.msra.mxu0 %v1383
    %1997 = vmatprep.subr.bf16.mxu0 %v1386
    %1998 = vmatpush1.bf16.msra.mxu0 %v1385
    %1999 = vmatprep.subr.bf16.mxu0 %v1388
    %2000 = vmatpush1.bf16.msra.mxu0 %v1387
    %2001 = vmatprep.subr.bf16.mxu0 %v1390
    %2002 = vmatpush1.bf16.msra.mxu0 %v1389
    %2003 = vmatprep.subr.bf16.mxu0 %v1392
    %2004 = vmatpush1.bf16.msra.mxu0 %v1391
    %2005 = vmatprep.subr.bf16.mxu0 %v1394
    %2006 = vmatpush1.bf16.msra.mxu0 %v1393
    %2007 = vmatprep.subr.bf16.mxu0 %v1396
    %2008 = vmatpush1.bf16.msra.mxu0 %v1395
    %2009 = vmatprep.subr.bf16.mxu0 %v1398
    %2010 = vmatpush1.bf16.msra.mxu0 %v1397
    %2011 = vmatprep.subr.bf16.mxu0 %v1400
    %2012 = vmatpush1.bf16.msra.mxu0 %v1399
    %2013 = vmatprep.subr.bf16.mxu0 %v1402
    %2014 = vmatpush1.bf16.msra.mxu0 %v1401
    %2015 = vmatprep.subr.bf16.mxu0 %v1404
    %2016 = vmatpush1.bf16.msra.mxu0 %v1403
    %2017 = vmatprep.subr.bf16.mxu0 %v1406
    %2018 = vmatpush1.bf16.msra.mxu0 %v1405
    %2019 = vmatprep.subr.bf16.mxu0 %v1408
    %2020 = vmatpush1.bf16.msra.mxu0 %v1407
    %2021 = vmatprep.mubr.bf16.mxu0 %v358
    %2022 = vmatmul.mubr.bf16.gmra.mrb[0].mxu0 %v357
    %v2023 = vpop.f32.mrb[0].mxu0
    %v2024 = vadd.f32 %v1983, %v2023
    %v2025 = vpop.f32.mrb[0].mxu0
    %v2026 = vadd.f32 %v1985, %v2025
    %v2027 = vpop.f32.mrb[0].mxu0
    %v2028 = vpop.f32.mrb[0].mxu0
    %2029 = vdwg.mxu0
    %2030 = vmatprep.subr.bf16.mxu0 %v1410
    %2031 = vmatpush1.bf16.msra.mxu0 %v1409
    %2032 = vmatprep.subr.bf16.mxu0 %v1412
    %2033 = vmatpush1.bf16.msra.mxu0 %v1411
    %2034 = vmatprep.subr.bf16.mxu0 %v1414
    %2035 = vmatpush1.bf16.msra.mxu0 %v1413
    %2036 = vmatprep.subr.bf16.mxu0 %v1416
    %2037 = vmatpush1.bf16.msra.mxu0 %v1415
    %2038 = vmatprep.subr.bf16.mxu0 %v1418
    %2039 = vmatpush1.bf16.msra.mxu0 %v1417
    %2040 = vmatprep.subr.bf16.mxu0 %v1420
    %2041 = vmatpush1.bf16.msra.mxu0 %v1419
    %2042 = vmatprep.subr.bf16.mxu0 %v1422
    %2043 = vmatpush1.bf16.msra.mxu0 %v1421
    %2044 = vmatprep.subr.bf16.mxu0 %v1424
    %2045 = vmatpush1.bf16.msra.mxu0 %v1423
    %2046 = vmatprep.subr.bf16.mxu0 %v1426
    %2047 = vmatpush1.bf16.msra.mxu0 %v1425
    %2048 = vmatprep.subr.bf16.mxu0 %v1428
    %2049 = vmatpush1.bf16.msra.mxu0 %v1427
    %2050 = vmatprep.subr.bf16.mxu0 %v1430
    %2051 = vmatpush1.bf16.msra.mxu0 %v1429
    %2052 = vmatprep.subr.bf16.mxu0 %v1432
    %2053 = vmatpush1.bf16.msra.mxu0 %v1431
    %2054 = vmatprep.subr.bf16.mxu0 %v1434
    %2055 = vmatpush1.bf16.msra.mxu0 %v1433
    %2056 = vmatprep.subr.bf16.mxu0 %v1436
    %2057 = vmatpush1.bf16.msra.mxu0 %v1435
    %2058 = vmatprep.subr.bf16.mxu0 %v1438
    %2059 = vmatpush1.bf16.msra.mxu0 %v1437
    %2060 = vmatprep.subr.bf16.mxu0 %v1440
    %2061 = vmatpush1.bf16.msra.mxu0 %v1439
    %2062 = vmatprep.mubr.bf16.mxu0 %v360
    %2063 = vmatmul.mubr.bf16.gmra.mrb[0].mxu0 %v359
    %v2064 = vpop.f32.mrb[0].mxu0
    %v2065 = vadd.f32 %v2024, %v2064
    %v2066 = vpop.f32.mrb[0].mxu0
    %v2067 = vadd.f32 %v2026, %v2066
    %v2068 = vpop.f32.mrb[0].mxu0
    %v2069 = vpop.f32.mrb[0].mxu0
    %2070 = vdwg.mxu0
    %2071 = vmatprep.subr.bf16.mxu0 %v1442
    %2072 = vmatpush1.bf16.msra.mxu0 %v1441
    %2073 = vmatprep.subr.bf16.mxu0 %v1444
    %2074 = vmatpush1.bf16.msra.mxu0 %v1443
    %2075 = vmatprep.subr.bf16.mxu0 %v1446
    %2076 = vmatpush1.bf16.msra.mxu0 %v1445
    %2077 = vmatprep.subr.bf16.mxu0 %v1448
    %2078 = vmatpush1.bf16.msra.mxu0 %v1447
    %2079 = vmatprep.subr.bf16.mxu0 %v1450
    %2080 = vmatpush1.bf16.msra.mxu0 %v1449
    %2081 = vmatprep.subr.bf16.mxu0 %v1452
    %2082 = vmatpush1.bf16.msra.mxu0 %v1451
    %2083 = vmatprep.subr.bf16.mxu0 %v1454
    %2084 = vmatpush1.bf16.msra.mxu0 %v1453
    %2085 = vmatprep.subr.bf16.mxu0 %v1456
    %2086 = vmatpush1.bf16.msra.mxu0 %v1455
    %2087 = vmatprep.subr.bf16.mxu0 %v1458
    %2088 = vmatpush1.bf16.msra.mxu0 %v1457
    %2089 = vmatprep.subr.bf16.mxu0 %v1460
    %2090 = vmatpush1.bf16.msra.mxu0 %v1459
    %2091 = vmatprep.subr.bf16.mxu0 %v1462
    %2092 = vmatpush1.bf16.msra.mxu0 %v1461
    %2093 = vmatprep.subr.bf16.mxu0 %v1464
    %2094 = vmatpush1.bf16.msra.mxu0 %v1463
    %2095 = vmatprep.subr.bf16.mxu0 %v1466
    %2096 = vmatpush1.bf16.msra.mxu0 %v1465
    %2097 = vmatprep.subr.bf16.mxu0 %v1468
    %2098 = vmatpush1.bf16.msra.mxu0 %v1467
    %2099 = vmatprep.subr.bf16.mxu0 %v1470
    %2100 = vmatpush1.bf16.msra.mxu0 %v1469
    %2101 = vmatprep.subr.bf16.mxu0 %v1472
    %2102 = vmatpush1.bf16.msra.mxu0 %v1471
    %2103 = vmatprep.mubr.bf16.mxu0 %v362
    %2104 = vmatmul.mubr.bf16.gmra.mrb[0].mxu0 %v361
    %v2105 = vpop.f32.mrb[0].mxu0
    %v2106 = vadd.f32 %v2065, %v2105
    %v2107 = vpop.f32.mrb[0].mxu0
    %v2108 = vadd.f32 %v2067, %v2107
    %v2109 = vpop.f32.mrb[0].mxu0
    %v2110 = vpop.f32.mrb[0].mxu0
    %2111 = vdwg.mxu0
    %2112 = vmatprep.subr.bf16.mxu0 %v1474
    %2113 = vmatpush1.bf16.msra.mxu0 %v1473
    %2114 = vmatprep.subr.bf16.mxu0 %v1476
    %2115 = vmatpush1.bf16.msra.mxu0 %v1475
    %2116 = vmatprep.subr.bf16.mxu0 %v1478
    %2117 = vmatpush1.bf16.msra.mxu0 %v1477
    %2118 = vmatprep.subr.bf16.mxu0 %v1480
    %2119 = vmatpush1.bf16.msra.mxu0 %v1479
    %2120 = vmatprep.subr.bf16.mxu0 %v1482
    %2121 = vmatpush1.bf16.msra.mxu0 %v1481
    %2122 = vmatprep.subr.bf16.mxu0 %v1484
    %2123 = vmatpush1.bf16.msra.mxu0 %v1483
    %2124 = vmatprep.subr.bf16.mxu0 %v1486
    %2125 = vmatpush1.bf16.msra.mxu0 %v1485
    %2126 = vmatprep.subr.bf16.mxu0 %v1488
    %2127 = vmatpush1.bf16.msra.mxu0 %v1487
    %2128 = vmatprep.subr.bf16.mxu0 %v1490
    %2129 = vmatpush1.bf16.msra.mxu0 %v1489
    %2130 = vmatprep.subr.bf16.mxu0 %v1492
    %2131 = vmatpush1.bf16.msra.mxu0 %v1491
    %2132 = vmatprep.subr.bf16.mxu0 %v1494
    %2133 = vmatpush1.bf16.msra.mxu0 %v1493
    %2134 = vmatprep.subr.bf16.mxu0 %v1496
    %2135 = vmatpush1.bf16.msra.mxu0 %v1495
    %2136 = vmatprep.subr.bf16.mxu0 %v1498
    %2137 = vmatpush1.bf16.msra.mxu0 %v1497
    %2138 = vmatprep.subr.bf16.mxu0 %v1500
    %2139 = vmatpush1.bf16.msra.mxu0 %v1499
    %2140 = vmatprep.subr.bf16.mxu0 %v1502
    %2141 = vmatpush1.bf16.msra.mxu0 %v1501
    %2142 = vmatprep.subr.bf16.mxu0 %v1504
    %2143 = vmatpush1.bf16.msra.mxu0 %v1503
    %2144 = vmatprep.mubr.bf16.mxu0 %v364
    %2145 = vmatmul.mubr.bf16.gmra.mrb[0].mxu0 %v363
    %v2146 = vpop.f32.mrb[0].mxu0
    %v2147 = vadd.f32 %v2106, %v2146
    %v2148 = vpop.f32.mrb[0].mxu0
    %v2149 = vadd.f32 %v2108, %v2148
    %v2150 = vpop.f32.mrb[0].mxu0
    %v2151 = vpop.f32.mrb[0].mxu0
    %2152 = vdwg.mxu0
    %2153 = vmatprep.subr.bf16.mxu0 %v1506
    %2154 = vmatpush1.bf16.msra.mxu0 %v1505
    %2155 = vmatprep.subr.bf16.mxu0 %v1508
    %2156 = vmatpush1.bf16.msra.mxu0 %v1507
    %2157 = vmatprep.subr.bf16.mxu0 %v1510
    %2158 = vmatpush1.bf16.msra.mxu0 %v1509
    %2159 = vmatprep.subr.bf16.mxu0 %v1512
    %2160 = vmatpush1.bf16.msra.mxu0 %v1511
    %2161 = vmatprep.subr.bf16.mxu0 %v1514
    %2162 = vmatpush1.bf16.msra.mxu0 %v1513
    %2163 = vmatprep.subr.bf16.mxu0 %v1516
    %2164 = vmatpush1.bf16.msra.mxu0 %v1515
    %2165 = vmatprep.subr.bf16.mxu0 %v1518
    %2166 = vmatpush1.bf16.msra.mxu0 %v1517
    %2167 = vmatprep.subr.bf16.mxu0 %v1520
    %2168 = vmatpush1.bf16.msra.mxu0 %v1519
    %2169 = vmatprep.subr.bf16.mxu0 %v1522
    %2170 = vmatpush1.bf16.msra.mxu0 %v1521
    %2171 = vmatprep.subr.bf16.mxu0 %v1524
    %2172 = vmatpush1.bf16.msra.mxu0 %v1523
    %2173 = vmatprep.subr.bf16.mxu0 %v1526
    %2174 = vmatpush1.bf16.msra.mxu0 %v1525
    %2175 = vmatprep.subr.bf16.mxu0 %v1528
    %2176 = vmatpush1.bf16.msra.mxu0 %v1527
    %2177 = vmatprep.subr.bf16.mxu0 %v1530
    %2178 = vmatpush1.bf16.msra.mxu0 %v1529
    %2179 = vmatprep.subr.bf16.mxu0 %v1532
    %2180 = vmatpush1.bf16.msra.mxu0 %v1531
    %2181 = vmatprep.subr.bf16.mxu0 %v1534
    %2182 = vmatpush1.bf16.msra.mxu0 %v1533
    %2183 = vmatprep.subr.bf16.mxu0 %v1536
    %2184 = vmatpush1.bf16.msra.mxu0 %v1535
    %2185 = vmatprep.mubr.bf16.mxu0 %v366
    %2186 = vmatmul.mubr.bf16.gmra.mrb[0].mxu0 %v365
    %v2187 = vpop.f32.mrb[0].mxu0
    %v2188 = vadd.f32 %v2147, %v2187
    %v2189 = vpop.f32.mrb[0].mxu0
    %v2190 = vadd.f32 %v2149, %v2189
    %v2191 = vpop.f32.mrb[0].mxu0
    %v2192 = vpop.f32.mrb[0].mxu0
    %2193 = vdwg.mxu0
    %2194 = vst [vmem:[%s2] sm:$0xff] %v2188
    %2195 = vst [vmem:[%s2 + $0x8] sm:$0xff] %v2190
    // Predicated region
    $region14: #{_fir_overlap_save.1} parent=1 // pred_check
      _
    $region15: #{_fir_overlap_save.1} parent=1 // pred_check_branch
      %2197 = sbr.rel (0) target = $region17
    $region16: #{_fir_overlap_save.1} parent=1 // pred_region
      _
    $region17: #{_fir_overlap_save.1} parent=1 // pred_fallthru
      _
    // Predicated region
    $region18: #{_fir_overlap_save.1} parent=1 // pred_check
      _
    $region19: #{_fir_overlap_save.1} parent=1 // pred_check_branch
      %2199 = sbr.rel (0) target = $region21
    $region20: #{_fir_overlap_save.1} parent=1 // pred_region
      _
    $region21: #{_fir_overlap_save.1} parent=1 // pred_fallthru
      _
    %2200 = vsyncpa [#allocation3], 1

</llo_original>
